<compile_context>
chip_gen: v7x
topology: tpu7x:2x2x1
jax: 0.10.0
libtpu: 0.0.40
codegen_flags: <defaults>
</compile_context>

<pallas_src>
import jax
import jax.numpy as jnp
from jax.experimental import pallas as pl
from jax.experimental.pallas import tpu as pltpu

K_IN = 28 * 28      # 784
K_PAD = 896         # next multiple of 128
H = 512
N_OUT = 10
N_PAD = 128         # lane-dense padded output width


def mlp_kernel(x_ref, w1_ref, b1_ref, w2_ref, b2_ref, w3_ref, b3_ref, out_ref):
    # Layer 1: (TB, 896)bf16 @ (896, 512)bf16 -> f32 acc, + bias, ReLU
    h = jnp.dot(x_ref[...], w1_ref[...], preferred_element_type=jnp.float32)
    h = jnp.maximum(h + b1_ref[...], 0.0)
    # Dropout(0.25) -> identity in eval mode.

    # Layer 2: (TB, 512) @ (512, 512)
    h = jnp.dot(h.astype(jnp.bfloat16), w2_ref[...],
                preferred_element_type=jnp.float32)
    h = jnp.maximum(h + b2_ref[...], 0.0)
    # Dropout(0.25) -> identity in eval mode.

    # Layer 3: (TB, 512) @ (512, 128)   (cols 10..127 are zero padding)
    h = jnp.dot(h.astype(jnp.bfloat16), w3_ref[...],
                preferred_element_type=jnp.float32)
    out_ref[...] = jnp.maximum(h + b3_ref[...], 0.0)


def _round_up(n, m):
    return (n + m - 1) // m * m


def _choose_batch_tile(B):
    # >=2 grid steps when possible (v7x has 2 TCs), rows a multiple of 8,
    # capped at 256 so double-buffered activation tiles + resident weights fit
    # v5e's 16 MiB default scoped VMEM and v7x's 64 MiB VMEM. Production
    # batches want >=256 rows/tile to amortize the one-time weight DMA.
    tb = min(256, _round_up(max(B // 2, 8), 8))
    return max(tb, 8)


def neural_network_forward(x_nchw, params):
    """x_nchw: (B, 1, 28, 28) float32.  Returns (B, 10) float32."""
    w1, b1, w2, b2, w3, b3 = params
    B = x_nchw.shape[0]

    TB = _choose_batch_tile(B)
    B_pad = _round_up(B, TB)

    # --- plain-JAX glue: flatten, pad, cast MXU operands to bf16 ---
    x_flat = x_nchw.reshape(B, K_IN).astype(jnp.bfloat16)       # nn.Flatten
    x_p = jnp.pad(x_flat, ((0, B_pad - B), (0, K_PAD - K_IN)))

    w1_p = jnp.pad(w1.astype(jnp.bfloat16), ((0, K_PAD - K_IN), (0, 0)))
    w2_p = w2.astype(jnp.bfloat16)
    w3_p = jnp.pad(w3.astype(jnp.bfloat16), ((0, 0), (0, N_PAD - N_OUT)))
    b1_p = b1.astype(jnp.float32)                               # (1, 512)
    b2_p = b2.astype(jnp.float32)                               # (1, 512)
    b3_p = jnp.pad(b3.astype(jnp.float32), ((0, 0), (0, N_PAD - N_OUT)))

    grid = (B_pad // TB,)
    const = lambda i: (0, 0)   # weights/biases: same block every grid step

    out_pad = pl.pallas_call(
        mlp_kernel,
        out_shape=jax.ShapeDtypeStruct((B_pad, N_PAD), jnp.float32),
        grid=grid,
        in_specs=[
            pl.BlockSpec((TB, K_PAD), lambda i: (i, 0)),   # x tile (pipelined)
            pl.BlockSpec((K_PAD, H), const),               # w1 (VMEM resident)
            pl.BlockSpec((1, H), const),                   # b1
            pl.BlockSpec((H, H), const),                   # w2
            pl.BlockSpec((1, H), const),                   # b2
            pl.BlockSpec((H, N_PAD), const),               # w3 (padded)
            pl.BlockSpec((1, N_PAD), const),               # b3 (padded)
        ],
        out_specs=pl.BlockSpec((TB, N_PAD), lambda i: (i, 0)),
        compiler_params=pltpu.CompilerParams(
            dimension_semantics=("parallel",),
            vmem_limit_bytes=32 * 1024 * 1024,
        ),
    )(x_p, w1_p, b1_p, w2_p, b2_p, w3_p, b3_p)

    return out_pad[:B, :N_OUT]


def init_params(key):
    """Deterministic parameter init matching nn.Linear shapes.

    PyTorch stores Linear weights as (out, in); here weights are (in, out) so
    the kernel computes x @ W directly.  Biases are (1, out) rows.
    """
    k1, k2, k3, k4, k5, k6 = jax.random.split(key, 6)

    def uinit(k, shape, fan_in):
        bound = 1.0 / jnp.sqrt(fan_in)
        return jax.random.uniform(k, shape, jnp.float32, -bound, bound)

    w1 = uinit(k1, (K_IN, H), float(K_IN))
    b1 = uinit(k2, (1, H), float(K_IN))
    w2 = uinit(k3, (H, H), float(H))
    b2 = uinit(k4, (1, H), float(H))
    w3 = uinit(k5, (H, N_OUT), float(H))
    b3 = uinit(k6, (1, N_OUT), float(H))
    return (w1, b1, w2, b2, w3, b3)


def reference_forward(x_nchw, params):
    """Plain-JAX f32 reference (eval-mode dropout = identity)."""
    w1, b1, w2, b2, w3, b3 = params
    x = x_nchw.reshape(x_nchw.shape[0], -1)
    h = jnp.maximum(x @ w1 + b1, 0.0)
    h = jnp.maximum(h @ w2 + b2, 0.0)
    return jnp.maximum(h @ w3 + b3, 0.0)


if __name__ == "__main__":
    key = jax.random.PRNGKey(0)
    k_params, k_x = jax.random.split(key)

    params = init_params(k_params)
    # Small MNIST-like batch: (B, C, H, W) = (16, 1, 28, 28).
    # B=16 with TB=8 -> 2 grid steps, exercising the pipelined batch grid.
    x = jax.random.normal(k_x, (16, 1, 28, 28), jnp.float32)

    fwd = jax.jit(neural_network_forward)
    out = jax.block_until_ready(fwd(x, params))

    ref = reference_forward(x, params)
    assert out.shape == (16, 10), out.shape
    # bf16 MXU operands with f32 accumulation -> small quantization error vs
    # the pure-f32 reference.
    assert jnp.allclose(out, ref, atol=3e-2, rtol=3e-2), "mismatch vs reference"

    print("KERNEL_OK")
</pallas_src>

<mosaic_0001>
module attributes {stable_mosaic.version = 11 : i64} {
  func.func @mlp_kernel(%arg0: i32, %arg1: memref<8x896xbf16, #tpu.memory_space<vmem>>, %arg2: memref<896x512xbf16, #tpu.memory_space<vmem>>, %arg3: memref<1x512xf32, #tpu.memory_space<vmem>>, %arg4: memref<512x512xbf16, #tpu.memory_space<vmem>>, %arg5: memref<1x512xf32, #tpu.memory_space<vmem>>, %arg6: memref<512x128xbf16, #tpu.memory_space<vmem>>, %arg7: memref<1x128xf32, #tpu.memory_space<vmem>>, %arg8: memref<8x128xf32, #tpu.memory_space<vmem>>) attributes {dimension_semantics = [#tpu.dimension_semantics<parallel>], iteration_bounds = array<i64: 2>, scalar_prefetch = 0 : i64, scratch_operands = 0 : i64, tpu.core_type = #tpu.core_type<tc>, window_params = [{transform_indices = @transform_0, window_bounds = array<i64: 8, 896>}, {pipeline_mode = #tpu.pipeline_mode<synchronous>, transform_indices = @transform_1, window_bounds = array<i64: 896, 512>}, {pipeline_mode = #tpu.pipeline_mode<synchronous>, transform_indices = @transform_2, window_bounds = array<i64: 1, 512>}, {pipeline_mode = #tpu.pipeline_mode<synchronous>, transform_indices = @transform_3, window_bounds = array<i64: 512, 512>}, {pipeline_mode = #tpu.pipeline_mode<synchronous>, transform_indices = @transform_4, window_bounds = array<i64: 1, 512>}, {pipeline_mode = #tpu.pipeline_mode<synchronous>, transform_indices = @transform_5, window_bounds = array<i64: 512, 128>}, {pipeline_mode = #tpu.pipeline_mode<synchronous>, transform_indices = @transform_6, window_bounds = array<i64: 1, 128>}, {transform_indices = @transform_7, window_bounds = array<i64: 8, 128>}]} {
    %c0 = arith.constant 0 : index
    %c0_0 = arith.constant 0 : index
    %0 = vector.load %arg1[%c0, %c0_0] : memref<8x896xbf16, #tpu.memory_space<vmem>>, vector<8x896xbf16>
    %c0_1 = arith.constant 0 : index
    %c0_2 = arith.constant 0 : index
    %1 = vector.load %arg2[%c0_1, %c0_2] : memref<896x512xbf16, #tpu.memory_space<vmem>>, vector<896x512xbf16>
    %cst = arith.constant dense<0.000000e+00> : vector<8x512xf32>
    %2 = tpu.matmul %0, %1, %cst {dimension_numbers = #tpu.dot_dimension_numbers<[1], [0], [0], [1], [0, 0, 1, 1], [], []>} : vector<8x896xbf16>, vector<896x512xbf16>, vector<8x512xf32> -> vector<8x512xf32>
    %c0_3 = arith.constant 0 : index
    %c0_4 = arith.constant 0 : index
    %3 = vector.load %arg3[%c0_3, %c0_4] : memref<1x512xf32, #tpu.memory_space<vmem>>, vector<1x512xf32>
    %4 = vector.broadcast %3 : vector<1x512xf32> to vector<8x512xf32>
    %5 = arith.addf %2, %4 : vector<8x512xf32>
    %cst_5 = arith.constant 0.000000e+00 : f32
    %6 = vector.broadcast %cst_5 : f32 to vector<8x512xf32>
    %7 = arith.maximumf %5, %6 : vector<8x512xf32>
    %8 = arith.truncf %7 : vector<8x512xf32> to vector<8x512xbf16>
    %c0_6 = arith.constant 0 : index
    %c0_7 = arith.constant 0 : index
    %9 = vector.load %arg4[%c0_6, %c0_7] : memref<512x512xbf16, #tpu.memory_space<vmem>>, vector<512x512xbf16>
    %cst_8 = arith.constant dense<0.000000e+00> : vector<8x512xf32>
    %10 = tpu.matmul %8, %9, %cst_8 {dimension_numbers = #tpu.dot_dimension_numbers<[1], [0], [0], [1], [0, 0, 1, 1], [], []>} : vector<8x512xbf16>, vector<512x512xbf16>, vector<8x512xf32> -> vector<8x512xf32>
    %c0_9 = arith.constant 0 : index
    %c0_10 = arith.constant 0 : index
    %11 = vector.load %arg5[%c0_9, %c0_10] : memref<1x512xf32, #tpu.memory_space<vmem>>, vector<1x512xf32>
    %12 = vector.broadcast %11 : vector<1x512xf32> to vector<8x512xf32>
    %13 = arith.addf %10, %12 : vector<8x512xf32>
    %cst_11 = arith.constant 0.000000e+00 : f32
    %14 = vector.broadcast %cst_11 : f32 to vector<8x512xf32>
    %15 = arith.maximumf %13, %14 : vector<8x512xf32>
    %16 = arith.truncf %15 : vector<8x512xf32> to vector<8x512xbf16>
    %c0_12 = arith.constant 0 : index
    %c0_13 = arith.constant 0 : index
    %17 = vector.load %arg6[%c0_12, %c0_13] : memref<512x128xbf16, #tpu.memory_space<vmem>>, vector<512x128xbf16>
    %cst_14 = arith.constant dense<0.000000e+00> : vector<8x128xf32>
    %18 = tpu.matmul %16, %17, %cst_14 {dimension_numbers = #tpu.dot_dimension_numbers<[1], [0], [0], [1], [0, 0, 1, 1], [], []>} : vector<8x512xbf16>, vector<512x128xbf16>, vector<8x128xf32> -> vector<8x128xf32>
    %c0_15 = arith.constant 0 : index
    %c0_16 = arith.constant 0 : index
    %19 = vector.load %arg7[%c0_15, %c0_16] : memref<1x128xf32, #tpu.memory_space<vmem>>, vector<1x128xf32>
    %20 = vector.broadcast %19 : vector<1x128xf32> to vector<8x128xf32>
    %21 = arith.addf %18, %20 : vector<8x128xf32>
    %cst_17 = arith.constant 0.000000e+00 : f32
    %22 = vector.broadcast %cst_17 : f32 to vector<8x128xf32>
    %23 = arith.maximumf %21, %22 : vector<8x128xf32>
    %c0_18 = arith.constant 0 : index
    %c0_19 = arith.constant 0 : index
    %24 = vector.load %arg8[%c0_18, %c0_19] : memref<8x128xf32, #tpu.memory_space<vmem>>, vector<8x128xf32>
    tpu.vector_store %arg8[%c0_18, %c0_19], %23 {strides = array<i32>} : memref<8x128xf32, #tpu.memory_space<vmem>>, vector<8x128xf32>,
    return
  }
  func.func @transform_0(%arg0: i32) -> (i32, i32) {
    %c0_i32 = arith.constant 0 : i32
    %c0_i32_0 = arith.constant 0 : i32
    return %arg0, %c0_i32 : i32, i32
  }
  func.func @transform_1(%arg0: i32) -> (i32, i32) {
    %c0_i32 = arith.constant 0 : i32
    %c0_i32_0 = arith.constant 0 : i32
    %c0_i32_1 = arith.constant 0 : i32
    return %c0_i32, %c0_i32_0 : i32, i32
  }
  func.func @transform_2(%arg0: i32) -> (i32, i32) {
    %c0_i32 = arith.constant 0 : i32
    %c0_i32_0 = arith.constant 0 : i32
    %c0_i32_1 = arith.constant 0 : i32
    return %c0_i32, %c0_i32_0 : i32, i32
  }
  func.func @transform_3(%arg0: i32) -> (i32, i32) {
    %c0_i32 = arith.constant 0 : i32
    %c0_i32_0 = arith.constant 0 : i32
    %c0_i32_1 = arith.constant 0 : i32
    return %c0_i32, %c0_i32_0 : i32, i32
  }
  func.func @transform_4(%arg0: i32) -> (i32, i32) {
    %c0_i32 = arith.constant 0 : i32
    %c0_i32_0 = arith.constant 0 : i32
    %c0_i32_1 = arith.constant 0 : i32
    return %c0_i32, %c0_i32_0 : i32, i32
  }
  func.func @transform_5(%arg0: i32) -> (i32, i32) {
    %c0_i32 = arith.constant 0 : i32
    %c0_i32_0 = arith.constant 0 : i32
    %c0_i32_1 = arith.constant 0 : i32
    return %c0_i32, %c0_i32_0 : i32, i32
  }
  func.func @transform_6(%arg0: i32) -> (i32, i32) {
    %c0_i32 = arith.constant 0 : i32
    %c0_i32_0 = arith.constant 0 : i32
    %c0_i32_1 = arith.constant 0 : i32
    return %c0_i32, %c0_i32_0 : i32, i32
  }
  func.func @transform_7(%arg0: i32) -> (i32, i32) {
    %c0_i32 = arith.constant 0 : i32
    %c0_i32_0 = arith.constant 0 : i32
    return %arg0, %c0_i32 : i32, i32
  }
}

</mosaic_0001>

<llo_original>
// kernel: neural_network_forward.1
$region0: #{neural_network_forward.1}
  #allocation0 [shape = 'u32[]', space=smem, size = 0x4, offset = 0x4, fixed_abs, tag = 'smem constant byte address 0x4 - core index']
  #allocation1 [shape = 'u32[144,128]{1,0:T(1,128)}', space=vmem, size = 0x12000, scoped, tag = 'internal scratch']
  %s0 = inlined_call_operand.vmem [shape: bf16[16,896], index: 0, kind: input, shape index: {}]
  %s1 = inlined_call_operand.vmem [shape: bf16[896,512], index: 1, kind: input, shape index: {}]
  %s2 = inlined_call_operand.vmem [shape: f32[1,512], index: 2, kind: input, shape index: {}]
  %s3 = inlined_call_operand.vmem [shape: bf16[512,512], index: 3, kind: input, shape index: {}]
  %s4 = inlined_call_operand.vmem [shape: f32[1,512], index: 4, kind: input, shape index: {}]
  %s5 = inlined_call_operand.vmem [shape: bf16[512,128], index: 5, kind: input, shape index: {}]
  %s6 = inlined_call_operand.vmem [shape: f32[1,128], index: 6, kind: input, shape index: {}]
  %s7 = inlined_call_operand.hbm [shape: f32[16,128], index: 7, kind: output, shape index: {}]
  %s8 = sld [smem:[#allocation0]]
  $region61: #{neural_network_forward.1} parent=0
    _
  %s10 = ssub.s32 1, %s8
  %s11 = scalar_select 0, %s10, %s8
  $region1: #{neural_network_forward.1} parent=0
    #allocation2 [shape = 'u8[8192]{0}', space=vmem, size = 0x2000, scoped, tag = 'output window, operand 0']
    #allocation3 [shape = 's32[2]{0}', space=sflag, size = 0x8, scoped, tag = 'scoped memory for neural_network_forward.1']
    %12 = vsyncpa [#allocation3], 0
    %s13 = scalar_lea.sflag [#allocation3], 1
    %14 = vsyncpa %s13, 0
    loop: start=0, step=1, limit=4
    $region2: #{neural_network_forward.1} parent=1 // loop_pre_header
      _
    $region3: #{neural_network_forward.1} parent=1 // loop_header
      %s16 = sphi 0, %s20
      %p17 = scmp.ge.s32.totalorder %s16, 4
      %s26 = sphi 0, %s28
      %s29 = sphi 0, %s26
      %s30 = sphi 0, %s29
      %s46 = sphi 0, %s30
      %s50 = sphi 0, %s50
      %s52 = sphi 0, %s50
      %s53 = sphi 0, %s52
      %s67 = sphi 0, %s53
      %s71 = sphi 0, %s71
      %s73 = sphi 0, %s71
      %s74 = sphi 0, %s73
      %s88 = sphi 0, %s74
      %s92 = sphi 0, %s92
      %s94 = sphi 0, %s92
      %s95 = sphi 0, %s94
      %s109 = sphi 0, %s95
      %s113 = sphi 0, %s113
      %s115 = sphi 0, %s113
      %s116 = sphi 0, %s115
      %s130 = sphi 0, %s116
      %s134 = sphi 0, %s134
      %s136 = sphi 0, %s134
      %s137 = sphi 0, %s136
      %s151 = sphi 0, %s137
      %s155 = sphi 0, %s155
      %s157 = sphi 0, %s155
      %s158 = sphi 0, %s157
      %s172 = sphi 0, %s158
      %s178 = sphi 0, %s180
      %s181 = sphi 0, %s178
      %s182 = sphi 0, %s181
      %s198 = sphi 0, %s182
    $region4: #{neural_network_forward.1} parent=1 // loop_header_branch
      %19 = sbr.rel (%p17) target = $region8
    $region5: #{neural_network_forward.1} parent=1 // loop_body
      %s21 = ssub.s32 %s16, 1
      %s22 = ssub.s32 %s16, 2
      %s23 = sadd.s32 %s16, 1
      %s24 = ssub.s32 %s16, %s23
      %p25 = scmp.eq.s32.totalorder %s24, 0
      %s27 = sadd.s32 %s26, 1
      %s28 = scalar_select %p25, %s26, %s27
      %p31 = pneg %p25
      %p32 = scmp.eq.s32.totalorder %s16, 1
      %p33 = por %p31, %p32
      %p34 = scmp.ne.s32.totalorder %s26, %s29
      %p35 = scmp.eq.s32.totalorder %s16, 0
      %p36 = por %p34, %p35
      %p37 = scmp.ne.s32.totalorder %s26, %s29
      %p38 = scmp.eq.s32.totalorder %s21, 1
      %p39 = por %p37, %p38
      %p40 = scmp.ne.s32.totalorder %s29, %s30
      %p41 = scmp.eq.s32.totalorder %s21, 0
      %p42 = por %p40, %p41
      %p43 = scmp.ne.s32.totalorder %s29, %s30
      %p44 = scmp.eq.s32.totalorder %s22, 1
      %p45 = por %p43, %p44
      %p47 = scmp.ne.s32.totalorder %s30, %s46
      %p48 = scmp.eq.s32.totalorder %s22, 0
      %p49 = por %p47, %p48
      %s51 = sadd.s32 %s50, 1
      %p54 = scmp.eq.s32.totalorder %s16, 1
      %p55 = scmp.ne.s32.totalorder %s50, %s52
      %p56 = scmp.eq.s32.totalorder %s16, 0
      %p57 = por %p55, %p56
      %p58 = scmp.ne.s32.totalorder %s50, %s52
      %p59 = scmp.eq.s32.totalorder %s21, 1
      %p60 = por %p58, %p59
      %p61 = scmp.ne.s32.totalorder %s52, %s53
      %p62 = scmp.eq.s32.totalorder %s21, 0
      %p63 = por %p61, %p62
      %p64 = scmp.ne.s32.totalorder %s52, %s53
      %p65 = scmp.eq.s32.totalorder %s22, 1
      %p66 = por %p64, %p65
      %p68 = scmp.ne.s32.totalorder %s53, %s67
      %p69 = scmp.eq.s32.totalorder %s22, 0
      %p70 = por %p68, %p69
      %s72 = sadd.s32 %s71, 1
      %p75 = scmp.eq.s32.totalorder %s16, 1
      %p76 = scmp.ne.s32.totalorder %s71, %s73
      %p77 = scmp.eq.s32.totalorder %s16, 0
      %p78 = por %p76, %p77
      %p79 = scmp.ne.s32.totalorder %s71, %s73
      %p80 = scmp.eq.s32.totalorder %s21, 1
      %p81 = por %p79, %p80
      %p82 = scmp.ne.s32.totalorder %s73, %s74
      %p83 = scmp.eq.s32.totalorder %s21, 0
      %p84 = por %p82, %p83
      %p85 = scmp.ne.s32.totalorder %s73, %s74
      %p86 = scmp.eq.s32.totalorder %s22, 1
      %p87 = por %p85, %p86
      %p89 = scmp.ne.s32.totalorder %s74, %s88
      %p90 = scmp.eq.s32.totalorder %s22, 0
      %p91 = por %p89, %p90
      %s93 = sadd.s32 %s92, 1
      %p96 = scmp.eq.s32.totalorder %s16, 1
      %p97 = scmp.ne.s32.totalorder %s92, %s94
      %p98 = scmp.eq.s32.totalorder %s16, 0
      %p99 = por %p97, %p98
      %p100 = scmp.ne.s32.totalorder %s92, %s94
      %p101 = scmp.eq.s32.totalorder %s21, 1
      %p102 = por %p100, %p101
      %p103 = scmp.ne.s32.totalorder %s94, %s95
      %p104 = scmp.eq.s32.totalorder %s21, 0
      %p105 = por %p103, %p104
      %p106 = scmp.ne.s32.totalorder %s94, %s95
      %p107 = scmp.eq.s32.totalorder %s22, 1
      %p108 = por %p106, %p107
      %p110 = scmp.ne.s32.totalorder %s95, %s109
      %p111 = scmp.eq.s32.totalorder %s22, 0
      %p112 = por %p110, %p111
      %s114 = sadd.s32 %s113, 1
      %p117 = scmp.eq.s32.totalorder %s16, 1
      %p118 = scmp.ne.s32.totalorder %s113, %s115
      %p119 = scmp.eq.s32.totalorder %s16, 0
      %p120 = por %p118, %p119
      %p121 = scmp.ne.s32.totalorder %s113, %s115
      %p122 = scmp.eq.s32.totalorder %s21, 1
      %p123 = por %p121, %p122
      %p124 = scmp.ne.s32.totalorder %s115, %s116
      %p125 = scmp.eq.s32.totalorder %s21, 0
      %p126 = por %p124, %p125
      %p127 = scmp.ne.s32.totalorder %s115, %s116
      %p128 = scmp.eq.s32.totalorder %s22, 1
      %p129 = por %p127, %p128
      %p131 = scmp.ne.s32.totalorder %s116, %s130
      %p132 = scmp.eq.s32.totalorder %s22, 0
      %p133 = por %p131, %p132
      %s135 = sadd.s32 %s134, 1
      %p138 = scmp.eq.s32.totalorder %s16, 1
      %p139 = scmp.ne.s32.totalorder %s134, %s136
      %p140 = scmp.eq.s32.totalorder %s16, 0
      %p141 = por %p139, %p140
      %p142 = scmp.ne.s32.totalorder %s134, %s136
      %p143 = scmp.eq.s32.totalorder %s21, 1
      %p144 = por %p142, %p143
      %p145 = scmp.ne.s32.totalorder %s136, %s137
      %p146 = scmp.eq.s32.totalorder %s21, 0
      %p147 = por %p145, %p146
      %p148 = scmp.ne.s32.totalorder %s136, %s137
      %p149 = scmp.eq.s32.totalorder %s22, 1
      %p150 = por %p148, %p149
      %p152 = scmp.ne.s32.totalorder %s137, %s151
      %p153 = scmp.eq.s32.totalorder %s22, 0
      %p154 = por %p152, %p153
      %s156 = sadd.s32 %s155, 1
      %p159 = scmp.eq.s32.totalorder %s16, 1
      %p160 = scmp.ne.s32.totalorder %s155, %s157
      %p161 = scmp.eq.s32.totalorder %s16, 0
      %p162 = por %p160, %p161
      %p163 = scmp.ne.s32.totalorder %s155, %s157
      %p164 = scmp.eq.s32.totalorder %s21, 1
      %p165 = por %p163, %p164
      %p166 = scmp.ne.s32.totalorder %s157, %s158
      %p167 = scmp.eq.s32.totalorder %s21, 0
      %p168 = por %p166, %p167
      %p169 = scmp.ne.s32.totalorder %s157, %s158
      %p170 = scmp.eq.s32.totalorder %s22, 1
      %p171 = por %p169, %p170
      %p173 = scmp.ne.s32.totalorder %s158, %s172
      %p174 = scmp.eq.s32.totalorder %s22, 0
      %p175 = por %p173, %p174
      %s176 = ssub.s32 %s16, %s23
      %p177 = scmp.eq.s32.totalorder %s176, 0
      %s179 = sadd.s32 %s178, 1
      %s180 = scalar_select %p177, %s178, %s179
      %p183 = pneg %p177
      %p184 = scmp.eq.s32.totalorder %s16, 1
      %p185 = por %p183, %p184
      %p186 = scmp.ne.s32.totalorder %s178, %s181
      %p187 = scmp.eq.s32.totalorder %s16, 0
      %p188 = por %p186, %p187
      %p189 = scmp.ne.s32.totalorder %s178, %s181
      %p190 = scmp.eq.s32.totalorder %s21, 1
      %p191 = por %p189, %p190
      %p192 = scmp.ne.s32.totalorder %s181, %s182
      %p193 = scmp.eq.s32.totalorder %s21, 0
      %p194 = por %p192, %p193
      %p195 = scmp.ne.s32.totalorder %s181, %s182
      %p196 = scmp.eq.s32.totalorder %s22, 1
      %p197 = por %p195, %p196
      %p199 = scmp.ne.s32.totalorder %s182, %s198
      %p200 = scmp.eq.s32.totalorder %s22, 0
      %p201 = por %p199, %p200
      %p202 = scmp.le.s32.totalorder 1, %s16
      %p203 = scmp.lt.s32.totalorder %s16, 3
      %p204 = pnand %p202, %p203
      %p205 = pneg %p204
      // Predicated region
      $region9: #{neural_network_forward.1} parent=5 // pred_check
        _
      $region10: #{neural_network_forward.1} parent=5 // pred_check_branch
        %207 = sbr.rel (%p204) target = $region12
      $region11: #{neural_network_forward.1} parent=5 // pred_region
        %s208 = ssub.s32 %s16, 1
        // Predicated region
        $region13: #{neural_network_forward.1} parent=11 // pred_check
          %p209 = pneg %p63
        $region14: #{neural_network_forward.1} parent=11 // pred_check_branch
          %211 = sbr.rel (%p209) target = $region16
        $region15: #{neural_network_forward.1} parent=11 // pred_region
          _
        $region16: #{neural_network_forward.1} parent=11 // pred_fallthru
          _
        // Predicated region
        $region17: #{neural_network_forward.1} parent=11 // pred_check
          %p212 = pneg %p84
        $region18: #{neural_network_forward.1} parent=11 // pred_check_branch
          %214 = sbr.rel (%p212) target = $region20
        $region19: #{neural_network_forward.1} parent=11 // pred_region
          _
        $region20: #{neural_network_forward.1} parent=11 // pred_fallthru
          _
        // Predicated region
        $region21: #{neural_network_forward.1} parent=11 // pred_check
          %p215 = pneg %p105
        $region22: #{neural_network_forward.1} parent=11 // pred_check_branch
          %217 = sbr.rel (%p215) target = $region24
        $region23: #{neural_network_forward.1} parent=11 // pred_region
          _
        $region24: #{neural_network_forward.1} parent=11 // pred_fallthru
          _
        // Predicated region
        $region25: #{neural_network_forward.1} parent=11 // pred_check
          %p218 = pneg %p126
        $region26: #{neural_network_forward.1} parent=11 // pred_check_branch
          %220 = sbr.rel (%p218) target = $region28
        $region27: #{neural_network_forward.1} parent=11 // pred_region
          _
        $region28: #{neural_network_forward.1} parent=11 // pred_fallthru
          _
        // Predicated region
        $region29: #{neural_network_forward.1} parent=11 // pred_check
          %p221 = pneg %p147
        $region30: #{neural_network_forward.1} parent=11 // pred_check_branch
          %223 = sbr.rel (%p221) target = $region32
        $region31: #{neural_network_forward.1} parent=11 // pred_region
          _
        $region32: #{neural_network_forward.1} parent=11 // pred_fallthru
          _
        // Predicated region
        $region33: #{neural_network_forward.1} parent=11 // pred_check
          %p224 = pneg %p168
        $region34: #{neural_network_forward.1} parent=11 // pred_check_branch
          %226 = sbr.rel (%p224) target = $region36
        $region35: #{neural_network_forward.1} parent=11 // pred_region
          _
        $region36: #{neural_network_forward.1} parent=11 // pred_fallthru
          _
      $region12: #{neural_network_forward.1} parent=5 // pred_fallthru
        _
      %p227 = scmp.lt.s32.totalorder %s16, 2
      // Predicated region
      $region37: #{neural_network_forward.1} parent=5 // pred_check
        %p228 = pneg %p227
      $region38: #{neural_network_forward.1} parent=5 // pred_check_branch
        %230 = sbr.rel (%p228) target = $region40
      $region39: #{neural_network_forward.1} parent=5 // pred_region
        // Predicated region
        $region41: #{neural_network_forward.1} parent=39 // pred_check
          %p231 = pneg %p36
        $region42: #{neural_network_forward.1} parent=39 // pred_check_branch
          %233 = sbr.rel (%p231) target = $region44
        $region43: #{neural_network_forward.1} parent=39 // pred_region
          %p234 = scmp.lt.s32.totalorder %s16, 1
          %s235 = scalar_select %p234, %s16, 1
          %s236 = smul.addr %s235, 7
          %s237 = smul.addr %s236, 4
          %s238 = scalar_lea.vmem %s0, %s237
        $region44: #{neural_network_forward.1} parent=39 // pred_fallthru
          _
      $region40: #{neural_network_forward.1} parent=5 // pred_fallthru
        _
      %p239 = scmp.le.s32.totalorder 1, %s16
      %p240 = scmp.lt.s32.totalorder %s16, 3
      %p241 = pnand %p239, %p240
      %p242 = pneg %p241
      // Predicated region
      $region45: #{neural_network_forward.1} parent=5 // pred_check
        _
      $region46: #{neural_network_forward.1} parent=5 // pred_check_branch
        %244 = sbr.rel (%p241) target = $region48
      $region47: #{neural_network_forward.1} parent=5 // pred_region
        %s245 = ssub.s32 %s16, 1
        %p246 = scmp.lt.s32.totalorder %s21, 1
        %s247 = scalar_select %p246, %s21, 1
        %s248 = smul.addr %s247, 7
        %s249 = smul.addr %s248, 4
        %s250 = scalar_lea.vmem %s0, %s249
        %p251 = pneg %p42
        %p252 = pneg %p39
        %p253 = pneg %p63
        %p254 = pneg %p60
        %p255 = pneg %p84
        %p256 = pneg %p81
        %p257 = pneg %p105
        %p258 = pneg %p102
        %p259 = pneg %p126
        %p260 = pneg %p123
        %p261 = pneg %p147
        %p262 = pneg %p144
        %p263 = pneg %p168
        %p264 = pneg %p165
        %p265 = pneg %p194
        %p266 = pneg %p191
        %s267 = sand.u32 %s181, 1
        %s268 = scalar_lea.sflag [#allocation3], %s267
        %s269 = sand.u32 %s181, 1
        %s270 = smul.addr %s269, 8
        %s271 = scalar_lea.vmem [#allocation2], %s270
        %p272 = scmp.lt.s32.totalorder %s21, 1
        %s273 = scalar_select %p272, %s21, 1
        %s274 = smul.addr %s273, 7
        %s275 = smul.addr %s274, 4
        %s276 = scalar_lea.vmem %s0, %s275
        %v278 = vld [vmem:[%s276] sm:$0xff]
        %v279 = vld [vmem:[%s276 + $0x8] sm:$0xff]
        %v280 = vld [vmem:[%s276 + $0x10] sm:$0xff]
        %v281 = vld [vmem:[%s276 + $0x18] sm:$0xf]
        %v282 = vld [vmem:[%s1] sm:$0xff]
        %v283 = vld [vmem:[%s1 + $0x8] sm:$0xff]
        %v284 = vld [vmem:[%s1 + $0x10] sm:$0xff]
        %v285 = vld [vmem:[%s1 + $0x18] sm:$0xff]
        %v286 = vld [vmem:[%s1 + $0x20] sm:$0xff]
        %v287 = vld [vmem:[%s1 + $0x28] sm:$0xff]
        %v288 = vld [vmem:[%s1 + $0x30] sm:$0xff]
        %v289 = vld [vmem:[%s1 + $0x38] sm:$0xff]
        %v290 = vld [vmem:[%s1 + $0x40] sm:$0xff]
        %v291 = vld [vmem:[%s1 + $0x48] sm:$0xff]
        %v292 = vld [vmem:[%s1 + $0x50] sm:$0xff]
        %v293 = vld [vmem:[%s1 + $0x58] sm:$0xff]
        %v294 = vld [vmem:[%s1 + $0x60] sm:$0xff]
        %v295 = vld [vmem:[%s1 + $0x68] sm:$0xff]
        %v296 = vld [vmem:[%s1 + $0x70] sm:$0xff]
        %v297 = vld [vmem:[%s1 + $0x78] sm:$0xff]
        %v298 = vld [vmem:[%s1 + $0x80] sm:$0xff]
        %v299 = vld [vmem:[%s1 + $0x88] sm:$0xff]
        %v300 = vld [vmem:[%s1 + $0x90] sm:$0xff]
        %v301 = vld [vmem:[%s1 + $0x98] sm:$0xff]
        %v302 = vld [vmem:[%s1 + $0xa0] sm:$0xff]
        %v303 = vld [vmem:[%s1 + $0xa8] sm:$0xff]
        %v304 = vld [vmem:[%s1 + $0xb0] sm:$0xff]
        %v305 = vld [vmem:[%s1 + $0xb8] sm:$0xff]
        %v306 = vld [vmem:[%s1 + $0xc0] sm:$0xff]
        %v307 = vld [vmem:[%s1 + $0xc8] sm:$0xff]
        %v308 = vld [vmem:[%s1 + $0xd0] sm:$0xff]
        %v309 = vld [vmem:[%s1 + $0xd8] sm:$0xff]
        %v310 = vld [vmem:[%s1 + $0xe0] sm:$0xff]
        %v311 = vld [vmem:[%s1 + $0xe8] sm:$0xff]
        %v312 = vld [vmem:[%s1 + $0xf0] sm:$0xff]
        %v313 = vld [vmem:[%s1 + $0xf8] sm:$0xff]
        %v314 = vld [vmem:[%s1 + $0x100] sm:$0xff]
        %v315 = vld [vmem:[%s1 + $0x108] sm:$0xff]
        %v316 = vld [vmem:[%s1 + $0x110] sm:$0xff]
        %v317 = vld [vmem:[%s1 + $0x118] sm:$0xff]
        %v318 = vld [vmem:[%s1 + $0x120] sm:$0xff]
        %v319 = vld [vmem:[%s1 + $0x128] sm:$0xff]
        %v320 = vld [vmem:[%s1 + $0x130] sm:$0xff]
        %v321 = vld [vmem:[%s1 + $0x138] sm:$0xff]
        %v322 = vld [vmem:[%s1 + $0x140] sm:$0xff]
        %v323 = vld [vmem:[%s1 + $0x148] sm:$0xff]
        %v324 = vld [vmem:[%s1 + $0x150] sm:$0xff]
        %v325 = vld [vmem:[%s1 + $0x158] sm:$0xff]
        %v326 = vld [vmem:[%s1 + $0x160] sm:$0xff]
        %v327 = vld [vmem:[%s1 + $0x168] sm:$0xff]
        %v328 = vld [vmem:[%s1 + $0x170] sm:$0xff]
        %v329 = vld [vmem:[%s1 + $0x178] sm:$0xff]
        %v330 = vld [vmem:[%s1 + $0x180] sm:$0xff]
        %v331 = vld [vmem:[%s1 + $0x188] sm:$0xff]
        %v332 = vld [vmem:[%s1 + $0x190] sm:$0xff]
        %v333 = vld [vmem:[%s1 + $0x198] sm:$0xff]
        %v334 = vld [vmem:[%s1 + $0x1a0] sm:$0xff]
        %v335 = vld [vmem:[%s1 + $0x1a8] sm:$0xff]
        %v336 = vld [vmem:[%s1 + $0x1b0] sm:$0xff]
        %v337 = vld [vmem:[%s1 + $0x1b8] sm:$0xff]
        %v338 = vld [vmem:[%s1 + $0x1c0] sm:$0xff]
        %v339 = vld [vmem:[%s1 + $0x1c8] sm:$0xff]
        %v340 = vld [vmem:[%s1 + $0x1d0] sm:$0xff]
        %v341 = vld [vmem:[%s1 + $0x1d8] sm:$0xff]
        %v342 = vld [vmem:[%s1 + $0x1e0] sm:$0xff]
        %v343 = vld [vmem:[%s1 + $0x1e8] sm:$0xff]
        %v344 = vld [vmem:[%s1 + $0x1f0] sm:$0xff]
        %v345 = vld [vmem:[%s1 + $0x1f8] sm:$0xff]
        %v346 = vld [vmem:[%s1 + $0x200] sm:$0xff]
        %v347 = vld [vmem:[%s1 + $0x208] sm:$0xff]
        %v348 = vld [vmem:[%s1 + $0x210] sm:$0xff]
        %v349 = vld [vmem:[%s1 + $0x218] sm:$0xff]
        %v350 = vld [vmem:[%s1 + $0x220] sm:$0xff]
        %v351 = vld [vmem:[%s1 + $0x228] sm:$0xff]
        %v352 = vld [vmem:[%s1 + $0x230] sm:$0xff]
        %v353 = vld [vmem:[%s1 + $0x238] sm:$0xff]
        %v354 = vld [vmem:[%s1 + $0x240] sm:$0xff]
        %v355 = vld [vmem:[%s1 + $0x248] sm:$0xff]
        %v356 = vld [vmem:[%s1 + $0x250] sm:$0xff]
        %v357 = vld [vmem:[%s1 + $0x258] sm:$0xff]
        %v358 = vld [vmem:[%s1 + $0x260] sm:$0xff]
        %v359 = vld [vmem:[%s1 + $0x268] sm:$0xff]
        %v360 = vld [vmem:[%s1 + $0x270] sm:$0xff]
        %v361 = vld [vmem:[%s1 + $0x278] sm:$0xff]
        %v362 = vld [vmem:[%s1 + $0x280] sm:$0xff]
        %v363 = vld [vmem:[%s1 + $0x288] sm:$0xff]
        %v364 = vld [vmem:[%s1 + $0x290] sm:$0xff]
        %v365 = vld [vmem:[%s1 + $0x298] sm:$0xff]
        %v366 = vld [vmem:[%s1 + $0x2a0] sm:$0xff]
        %v367 = vld [vmem:[%s1 + $0x2a8] sm:$0xff]
        %v368 = vld [vmem:[%s1 + $0x2b0] sm:$0xff]
        %v369 = vld [vmem:[%s1 + $0x2b8] sm:$0xff]
        %v370 = vld [vmem:[%s1 + $0x2c0] sm:$0xff]
        %v371 = vld [vmem:[%s1 + $0x2c8] sm:$0xff]
        %v372 = vld [vmem:[%s1 + $0x2d0] sm:$0xff]
        %v373 = vld [vmem:[%s1 + $0x2d8] sm:$0xff]
        %v374 = vld [vmem:[%s1 + $0x2e0] sm:$0xff]
        %v375 = vld [vmem:[%s1 + $0x2e8] sm:$0xff]
        %v376 = vld [vmem:[%s1 + $0x2f0] sm:$0xff]
        %v377 = vld [vmem:[%s1 + $0x2f8] sm:$0xff]
        %v378 = vld [vmem:[%s1 + $0x300] sm:$0xff]
        %v379 = vld [vmem:[%s1 + $0x308] sm:$0xff]
        %v380 = vld [vmem:[%s1 + $0x310] sm:$0xff]
        %v381 = vld [vmem:[%s1 + $0x318] sm:$0xff]
        %v382 = vld [vmem:[%s1 + $0x320] sm:$0xff]
        %v383 = vld [vmem:[%s1 + $0x328] sm:$0xff]
        %v384 = vld [vmem:[%s1 + $0x330] sm:$0xff]
        %v385 = vld [vmem:[%s1 + $0x338] sm:$0xff]
        %v386 = vld [vmem:[%s1 + $0x340] sm:$0xff]
        %v387 = vld [vmem:[%s1 + $0x348] sm:$0xff]
        %v388 = vld [vmem:[%s1 + $0x350] sm:$0xff]
        %v389 = vld [vmem:[%s1 + $0x358] sm:$0xff]
        %v390 = vld [vmem:[%s1 + $0x360] sm:$0xff]
        %v391 = vld [vmem:[%s1 + $0x368] sm:$0xff]
        %v392 = vld [vmem:[%s1 + $0x370] sm:$0xff]
        %v393 = vld [vmem:[%s1 + $0x378] sm:$0xff]
        %v394 = vld [vmem:[%s1 + $0x380] sm:$0xff]
        %v395 = vld [vmem:[%s1 + $0x388] sm:$0xff]
        %v396 = vld [vmem:[%s1 + $0x390] sm:$0xff]
        %v397 = vld [vmem:[%s1 + $0x398] sm:$0xff]
        %v398 = vld [vmem:[%s1 + $0x3a0] sm:$0xff]
        %v399 = vld [vmem:[%s1 + $0x3a8] sm:$0xff]
        %v400 = vld [vmem:[%s1 + $0x3b0] sm:$0xff]
        %v401 = vld [vmem:[%s1 + $0x3b8] sm:$0xff]
        %v402 = vld [vmem:[%s1 + $0x3c0] sm:$0xff]
        %v403 = vld [vmem:[%s1 + $0x3c8] sm:$0xff]
        %v404 = vld [vmem:[%s1 + $0x3d0] sm:$0xff]
        %v405 = vld [vmem:[%s1 + $0x3d8] sm:$0xff]
        %v406 = vld [vmem:[%s1 + $0x3e0] sm:$0xff]
        %v407 = vld [vmem:[%s1 + $0x3e8] sm:$0xff]
        %v408 = vld [vmem:[%s1 + $0x3f0] sm:$0xff]
        %v409 = vld [vmem:[%s1 + $0x3f8] sm:$0xff]
        %v410 = vld [vmem:[%s1 + $0x400] sm:$0xff]
        %v411 = vld [vmem:[%s1 + $0x408] sm:$0xff]
        %v412 = vld [vmem:[%s1 + $0x410] sm:$0xff]
        %v413 = vld [vmem:[%s1 + $0x418] sm:$0xff]
        %v414 = vld [vmem:[%s1 + $0x420] sm:$0xff]
        %v415 = vld [vmem:[%s1 + $0x428] sm:$0xff]
        %v416 = vld [vmem:[%s1 + $0x430] sm:$0xff]
        %v417 = vld [vmem:[%s1 + $0x438] sm:$0xff]
        %v418 = vld [vmem:[%s1 + $0x440] sm:$0xff]
        %v419 = vld [vmem:[%s1 + $0x448] sm:$0xff]
        %v420 = vld [vmem:[%s1 + $0x450] sm:$0xff]
        %v421 = vld [vmem:[%s1 + $0x458] sm:$0xff]
        %v422 = vld [vmem:[%s1 + $0x460] sm:$0xff]
        %v423 = vld [vmem:[%s1 + $0x468] sm:$0xff]
        %v424 = vld [vmem:[%s1 + $0x470] sm:$0xff]
        %v425 = vld [vmem:[%s1 + $0x478] sm:$0xff]
        %v426 = vld [vmem:[%s1 + $0x480] sm:$0xff]
        %v427 = vld [vmem:[%s1 + $0x488] sm:$0xff]
        %v428 = vld [vmem:[%s1 + $0x490] sm:$0xff]
        %v429 = vld [vmem:[%s1 + $0x498] sm:$0xff]
        %v430 = vld [vmem:[%s1 + $0x4a0] sm:$0xff]
        %v431 = vld [vmem:[%s1 + $0x4a8] sm:$0xff]
        %v432 = vld [vmem:[%s1 + $0x4b0] sm:$0xff]
        %v433 = vld [vmem:[%s1 + $0x4b8] sm:$0xff]
        %v434 = vld [vmem:[%s1 + $0x4c0] sm:$0xff]
        %v435 = vld [vmem:[%s1 + $0x4c8] sm:$0xff]
        %v436 = vld [vmem:[%s1 + $0x4d0] sm:$0xff]
        %v437 = vld [vmem:[%s1 + $0x4d8] sm:$0xff]
        %v438 = vld [vmem:[%s1 + $0x4e0] sm:$0xff]
        %v439 = vld [vmem:[%s1 + $0x4e8] sm:$0xff]
        %v440 = vld [vmem:[%s1 + $0x4f0] sm:$0xff]
        %v441 = vld [vmem:[%s1 + $0x4f8] sm:$0xff]
        %v442 = vld [vmem:[%s1 + $0x500] sm:$0xff]
        %v443 = vld [vmem:[%s1 + $0x508] sm:$0xff]
        %v444 = vld [vmem:[%s1 + $0x510] sm:$0xff]
        %v445 = vld [vmem:[%s1 + $0x518] sm:$0xff]
        %v446 = vld [vmem:[%s1 + $0x520] sm:$0xff]
        %v447 = vld [vmem:[%s1 + $0x528] sm:$0xff]
        %v448 = vld [vmem:[%s1 + $0x530] sm:$0xff]
        %v449 = vld [vmem:[%s1 + $0x538] sm:$0xff]
        %v450 = vld [vmem:[%s1 + $0x540] sm:$0xff]
        %v451 = vld [vmem:[%s1 + $0x548] sm:$0xff]
        %v452 = vld [vmem:[%s1 + $0x550] sm:$0xff]
        %v453 = vld [vmem:[%s1 + $0x558] sm:$0xff]
        %v454 = vld [vmem:[%s1 + $0x560] sm:$0xff]
        %v455 = vld [vmem:[%s1 + $0x568] sm:$0xff]
        %v456 = vld [vmem:[%s1 + $0x570] sm:$0xff]
        %v457 = vld [vmem:[%s1 + $0x578] sm:$0xff]
        %v458 = vld [vmem:[%s1 + $0x580] sm:$0xff]
        %v459 = vld [vmem:[%s1 + $0x588] sm:$0xff]
        %v460 = vld [vmem:[%s1 + $0x590] sm:$0xff]
        %v461 = vld [vmem:[%s1 + $0x598] sm:$0xff]
        %v462 = vld [vmem:[%s1 + $0x5a0] sm:$0xff]
        %v463 = vld [vmem:[%s1 + $0x5a8] sm:$0xff]
        %v464 = vld [vmem:[%s1 + $0x5b0] sm:$0xff]
        %v465 = vld [vmem:[%s1 + $0x5b8] sm:$0xff]
        %v466 = vld [vmem:[%s1 + $0x5c0] sm:$0xff]
        %v467 = vld [vmem:[%s1 + $0x5c8] sm:$0xff]
        %v468 = vld [vmem:[%s1 + $0x5d0] sm:$0xff]
        %v469 = vld [vmem:[%s1 + $0x5d8] sm:$0xff]
        %v470 = vld [vmem:[%s1 + $0x5e0] sm:$0xff]
        %v471 = vld [vmem:[%s1 + $0x5e8] sm:$0xff]
        %v472 = vld [vmem:[%s1 + $0x5f0] sm:$0xff]
        %v473 = vld [vmem:[%s1 + $0x5f8] sm:$0xff]
        %v474 = vld [vmem:[%s1 + $0x600] sm:$0xff]
        %v475 = vld [vmem:[%s1 + $0x608] sm:$0xff]
        %v476 = vld [vmem:[%s1 + $0x610] sm:$0xff]
        %v477 = vld [vmem:[%s1 + $0x618] sm:$0xff]
        %v478 = vld [vmem:[%s1 + $0x620] sm:$0xff]
        %v479 = vld [vmem:[%s1 + $0x628] sm:$0xff]
        %v480 = vld [vmem:[%s1 + $0x630] sm:$0xff]
        %v481 = vld [vmem:[%s1 + $0x638] sm:$0xff]
        %v482 = vld [vmem:[%s1 + $0x640] sm:$0xff]
        %v483 = vld [vmem:[%s1 + $0x648] sm:$0xff]
        %v484 = vld [vmem:[%s1 + $0x650] sm:$0xff]
        %v485 = vld [vmem:[%s1 + $0x658] sm:$0xff]
        %v486 = vld [vmem:[%s1 + $0x660] sm:$0xff]
        %v487 = vld [vmem:[%s1 + $0x668] sm:$0xff]
        %v488 = vld [vmem:[%s1 + $0x670] sm:$0xff]
        %v489 = vld [vmem:[%s1 + $0x678] sm:$0xff]
        %v490 = vld [vmem:[%s1 + $0x680] sm:$0xff]
        %v491 = vld [vmem:[%s1 + $0x688] sm:$0xff]
        %v492 = vld [vmem:[%s1 + $0x690] sm:$0xff]
        %v493 = vld [vmem:[%s1 + $0x698] sm:$0xff]
        %v494 = vld [vmem:[%s1 + $0x6a0] sm:$0xff]
        %v495 = vld [vmem:[%s1 + $0x6a8] sm:$0xff]
        %v496 = vld [vmem:[%s1 + $0x6b0] sm:$0xff]
        %v497 = vld [vmem:[%s1 + $0x6b8] sm:$0xff]
        %v498 = vld [vmem:[%s1 + $0x6c0] sm:$0xff]
        %v499 = vld [vmem:[%s1 + $0x6c8] sm:$0xff]
        %v500 = vld [vmem:[%s1 + $0x6d0] sm:$0xff]
        %v501 = vld [vmem:[%s1 + $0x6d8] sm:$0xff]
        %v502 = vld [vmem:[%s1 + $0x6e0] sm:$0xff]
        %v503 = vld [vmem:[%s1 + $0x6e8] sm:$0xff]
        %v504 = vld [vmem:[%s1 + $0x6f0] sm:$0xff]
        %v505 = vld [vmem:[%s1 + $0x6f8] sm:$0xff]
        %v506 = vld [vmem:[%s2] sm:$0xf]
        %v508 = vlaneseq
        %v509 = vshrl.u32 %v508, 7
        %v510 = vsub.s32 0, %v509
        %v511 = vrot.slane %v506, %v510
        %v512 = vlaneseq
        %v513 = vshrl.u32 %v512, 7
        %v514 = vsub.s32 1, %v513
        %v515 = vrot.slane %v506, %v514
        %v516 = vlaneseq
        %v517 = vshrl.u32 %v516, 7
        %v518 = vsub.s32 2, %v517
        %v519 = vrot.slane %v506, %v518
        %v520 = vlaneseq
        %v521 = vshrl.u32 %v520, 7
        %v522 = vsub.s32 3, %v521
        %v523 = vrot.slane %v506, %v522
        %v532 = vunpack.c.l.b16 %v278
        %v533 = vunpack.c.h.b16 %v278
        %v534 = vunpack.c.l.b16 %v279
        %v535 = vunpack.c.h.b16 %v279
        %v536 = vunpack.c.l.b16 %v280
        %v537 = vunpack.c.h.b16 %v280
        %v538 = vunpack.c.l.b16 %v281
        %v539 = vpack.c.b16 %v532, %v532
        %v540 = vpack.c.b16 %v533, %v533
        %v541 = vpack.c.b16 %v534, %v534
        %v542 = vpack.c.b16 %v535, %v535
        %v543 = vpack.c.b16 %v536, %v536
        %v544 = vpack.c.b16 %v537, %v537
        %v545 = vpack.c.b16 %v538, %v538
        %v777 = vunpack.c.l.b16 %v282
        %v778 = vunpack.c.h.b16 %v282
        %v779 = vunpack.c.l.b16 %v283
        %v780 = vunpack.c.h.b16 %v283
        %v781 = vunpack.c.l.b16 %v284
        %v782 = vunpack.c.h.b16 %v284
        %v783 = vunpack.c.l.b16 %v285
        %v784 = vunpack.c.h.b16 %v285
        %v785 = vunpack.c.l.b16 %v286
        %v786 = vunpack.c.h.b16 %v286
        %v787 = vunpack.c.l.b16 %v287
        %v788 = vunpack.c.h.b16 %v287
        %v789 = vunpack.c.l.b16 %v288
        %v790 = vunpack.c.h.b16 %v288
        %v791 = vunpack.c.l.b16 %v289
        %v792 = vunpack.c.h.b16 %v289
        %v793 = vunpack.c.l.b16 %v290
        %v794 = vunpack.c.h.b16 %v290
        %v795 = vunpack.c.l.b16 %v291
        %v796 = vunpack.c.h.b16 %v291
        %v797 = vunpack.c.l.b16 %v292
        %v798 = vunpack.c.h.b16 %v292
        %v799 = vunpack.c.l.b16 %v293
        %v800 = vunpack.c.h.b16 %v293
        %v801 = vunpack.c.l.b16 %v294
        %v802 = vunpack.c.h.b16 %v294
        %v803 = vunpack.c.l.b16 %v295
        %v804 = vunpack.c.h.b16 %v295
        %v805 = vunpack.c.l.b16 %v296
        %v806 = vunpack.c.h.b16 %v296
        %v807 = vunpack.c.l.b16 %v297
        %v808 = vunpack.c.h.b16 %v297
        %v809 = vunpack.c.l.b16 %v298
        %v810 = vunpack.c.h.b16 %v298
        %v811 = vunpack.c.l.b16 %v299
        %v812 = vunpack.c.h.b16 %v299
        %v813 = vunpack.c.l.b16 %v300
        %v814 = vunpack.c.h.b16 %v300
        %v815 = vunpack.c.l.b16 %v301
        %v816 = vunpack.c.h.b16 %v301
        %v817 = vunpack.c.l.b16 %v302
        %v818 = vunpack.c.h.b16 %v302
        %v819 = vunpack.c.l.b16 %v303
        %v820 = vunpack.c.h.b16 %v303
        %v821 = vunpack.c.l.b16 %v304
        %v822 = vunpack.c.h.b16 %v304
        %v823 = vunpack.c.l.b16 %v305
        %v824 = vunpack.c.h.b16 %v305
        %v825 = vunpack.c.l.b16 %v306
        %v826 = vunpack.c.h.b16 %v306
        %v827 = vunpack.c.l.b16 %v307
        %v828 = vunpack.c.h.b16 %v307
        %v829 = vunpack.c.l.b16 %v308
        %v830 = vunpack.c.h.b16 %v308
        %v831 = vunpack.c.l.b16 %v309
        %v832 = vunpack.c.h.b16 %v309
        %v833 = vunpack.c.l.b16 %v310
        %v834 = vunpack.c.h.b16 %v310
        %v835 = vunpack.c.l.b16 %v311
        %v836 = vunpack.c.h.b16 %v311
        %v837 = vunpack.c.l.b16 %v312
        %v838 = vunpack.c.h.b16 %v312
        %v839 = vunpack.c.l.b16 %v313
        %v840 = vunpack.c.h.b16 %v313
        %v841 = vunpack.c.l.b16 %v314
        %v842 = vunpack.c.h.b16 %v314
        %v843 = vunpack.c.l.b16 %v315
        %v844 = vunpack.c.h.b16 %v315
        %v845 = vunpack.c.l.b16 %v316
        %v846 = vunpack.c.h.b16 %v316
        %v847 = vunpack.c.l.b16 %v317
        %v848 = vunpack.c.h.b16 %v317
        %v849 = vunpack.c.l.b16 %v318
        %v850 = vunpack.c.h.b16 %v318
        %v851 = vunpack.c.l.b16 %v319
        %v852 = vunpack.c.h.b16 %v319
        %v853 = vunpack.c.l.b16 %v320
        %v854 = vunpack.c.h.b16 %v320
        %v855 = vunpack.c.l.b16 %v321
        %v856 = vunpack.c.h.b16 %v321
        %v857 = vunpack.c.l.b16 %v322
        %v858 = vunpack.c.h.b16 %v322
        %v859 = vunpack.c.l.b16 %v323
        %v860 = vunpack.c.h.b16 %v323
        %v861 = vunpack.c.l.b16 %v324
        %v862 = vunpack.c.h.b16 %v324
        %v863 = vunpack.c.l.b16 %v325
        %v864 = vunpack.c.h.b16 %v325
        %v865 = vunpack.c.l.b16 %v326
        %v866 = vunpack.c.h.b16 %v326
        %v867 = vunpack.c.l.b16 %v327
        %v868 = vunpack.c.h.b16 %v327
        %v869 = vunpack.c.l.b16 %v328
        %v870 = vunpack.c.h.b16 %v328
        %v871 = vunpack.c.l.b16 %v329
        %v872 = vunpack.c.h.b16 %v329
        %v873 = vunpack.c.l.b16 %v330
        %v874 = vunpack.c.h.b16 %v330
        %v875 = vunpack.c.l.b16 %v331
        %v876 = vunpack.c.h.b16 %v331
        %v877 = vunpack.c.l.b16 %v332
        %v878 = vunpack.c.h.b16 %v332
        %v879 = vunpack.c.l.b16 %v333
        %v880 = vunpack.c.h.b16 %v333
        %v881 = vunpack.c.l.b16 %v334
        %v882 = vunpack.c.h.b16 %v334
        %v883 = vunpack.c.l.b16 %v335
        %v884 = vunpack.c.h.b16 %v335
        %v885 = vunpack.c.l.b16 %v336
        %v886 = vunpack.c.h.b16 %v336
        %v887 = vunpack.c.l.b16 %v337
        %v888 = vunpack.c.h.b16 %v337
        %v889 = vunpack.c.l.b16 %v338
        %v890 = vunpack.c.h.b16 %v338
        %v891 = vunpack.c.l.b16 %v339
        %v892 = vunpack.c.h.b16 %v339
        %v893 = vunpack.c.l.b16 %v340
        %v894 = vunpack.c.h.b16 %v340
        %v895 = vunpack.c.l.b16 %v341
        %v896 = vunpack.c.h.b16 %v341
        %v897 = vunpack.c.l.b16 %v342
        %v898 = vunpack.c.h.b16 %v342
        %v899 = vunpack.c.l.b16 %v343
        %v900 = vunpack.c.h.b16 %v343
        %v901 = vunpack.c.l.b16 %v344
        %v902 = vunpack.c.h.b16 %v344
        %v903 = vunpack.c.l.b16 %v345
        %v904 = vunpack.c.h.b16 %v345
        %v905 = vunpack.c.l.b16 %v346
        %v906 = vunpack.c.h.b16 %v346
        %v907 = vunpack.c.l.b16 %v347
        %v908 = vunpack.c.h.b16 %v347
        %v909 = vunpack.c.l.b16 %v348
        %v910 = vunpack.c.h.b16 %v348
        %v911 = vunpack.c.l.b16 %v349
        %v912 = vunpack.c.h.b16 %v349
        %v913 = vunpack.c.l.b16 %v350
        %v914 = vunpack.c.h.b16 %v350
        %v915 = vunpack.c.l.b16 %v351
        %v916 = vunpack.c.h.b16 %v351
        %v917 = vunpack.c.l.b16 %v352
        %v918 = vunpack.c.h.b16 %v352
        %v919 = vunpack.c.l.b16 %v353
        %v920 = vunpack.c.h.b16 %v353
        %v921 = vunpack.c.l.b16 %v354
        %v922 = vunpack.c.h.b16 %v354
        %v923 = vunpack.c.l.b16 %v355
        %v924 = vunpack.c.h.b16 %v355
        %v925 = vunpack.c.l.b16 %v356
        %v926 = vunpack.c.h.b16 %v356
        %v927 = vunpack.c.l.b16 %v357
        %v928 = vunpack.c.h.b16 %v357
        %v929 = vunpack.c.l.b16 %v358
        %v930 = vunpack.c.h.b16 %v358
        %v931 = vunpack.c.l.b16 %v359
        %v932 = vunpack.c.h.b16 %v359
        %v933 = vunpack.c.l.b16 %v360
        %v934 = vunpack.c.h.b16 %v360
        %v935 = vunpack.c.l.b16 %v361
        %v936 = vunpack.c.h.b16 %v361
        %v937 = vunpack.c.l.b16 %v362
        %v938 = vunpack.c.h.b16 %v362
        %v939 = vunpack.c.l.b16 %v363
        %v940 = vunpack.c.h.b16 %v363
        %v941 = vunpack.c.l.b16 %v364
        %v942 = vunpack.c.h.b16 %v364
        %v943 = vunpack.c.l.b16 %v365
        %v944 = vunpack.c.h.b16 %v365
        %v945 = vunpack.c.l.b16 %v366
        %v946 = vunpack.c.h.b16 %v366
        %v947 = vunpack.c.l.b16 %v367
        %v948 = vunpack.c.h.b16 %v367
        %v949 = vunpack.c.l.b16 %v368
        %v950 = vunpack.c.h.b16 %v368
        %v951 = vunpack.c.l.b16 %v369
        %v952 = vunpack.c.h.b16 %v369
        %v953 = vunpack.c.l.b16 %v370
        %v954 = vunpack.c.h.b16 %v370
        %v955 = vunpack.c.l.b16 %v371
        %v956 = vunpack.c.h.b16 %v371
        %v957 = vunpack.c.l.b16 %v372
        %v958 = vunpack.c.h.b16 %v372
        %v959 = vunpack.c.l.b16 %v373
        %v960 = vunpack.c.h.b16 %v373
        %v961 = vunpack.c.l.b16 %v374
        %v962 = vunpack.c.h.b16 %v374
        %v963 = vunpack.c.l.b16 %v375
        %v964 = vunpack.c.h.b16 %v375
        %v965 = vunpack.c.l.b16 %v376
        %v966 = vunpack.c.h.b16 %v376
        %v967 = vunpack.c.l.b16 %v377
        %v968 = vunpack.c.h.b16 %v377
        %v969 = vunpack.c.l.b16 %v378
        %v970 = vunpack.c.h.b16 %v378
        %v971 = vunpack.c.l.b16 %v379
        %v972 = vunpack.c.h.b16 %v379
        %v973 = vunpack.c.l.b16 %v380
        %v974 = vunpack.c.h.b16 %v380
        %v975 = vunpack.c.l.b16 %v381
        %v976 = vunpack.c.h.b16 %v381
        %v977 = vunpack.c.l.b16 %v382
        %v978 = vunpack.c.h.b16 %v382
        %v979 = vunpack.c.l.b16 %v383
        %v980 = vunpack.c.h.b16 %v383
        %v981 = vunpack.c.l.b16 %v384
        %v982 = vunpack.c.h.b16 %v384
        %v983 = vunpack.c.l.b16 %v385
        %v984 = vunpack.c.h.b16 %v385
        %v985 = vunpack.c.l.b16 %v386
        %v986 = vunpack.c.h.b16 %v386
        %v987 = vunpack.c.l.b16 %v387
        %v988 = vunpack.c.h.b16 %v387
        %v989 = vunpack.c.l.b16 %v388
        %v990 = vunpack.c.h.b16 %v388
        %v991 = vunpack.c.l.b16 %v389
        %v992 = vunpack.c.h.b16 %v389
        %v993 = vunpack.c.l.b16 %v390
        %v994 = vunpack.c.h.b16 %v390
        %v995 = vunpack.c.l.b16 %v391
        %v996 = vunpack.c.h.b16 %v391
        %v997 = vunpack.c.l.b16 %v392
        %v998 = vunpack.c.h.b16 %v392
        %v999 = vunpack.c.l.b16 %v393
        %v1000 = vunpack.c.h.b16 %v393
        %v1001 = vunpack.c.l.b16 %v394
        %v1002 = vunpack.c.h.b16 %v394
        %v1003 = vunpack.c.l.b16 %v395
        %v1004 = vunpack.c.h.b16 %v395
        %v1005 = vunpack.c.l.b16 %v396
        %v1006 = vunpack.c.h.b16 %v396
        %v1007 = vunpack.c.l.b16 %v397
        %v1008 = vunpack.c.h.b16 %v397
        %v1009 = vunpack.c.l.b16 %v398
        %v1010 = vunpack.c.h.b16 %v398
        %v1011 = vunpack.c.l.b16 %v399
        %v1012 = vunpack.c.h.b16 %v399
        %v1013 = vunpack.c.l.b16 %v400
        %v1014 = vunpack.c.h.b16 %v400
        %v1015 = vunpack.c.l.b16 %v401
        %v1016 = vunpack.c.h.b16 %v401
        %v1017 = vunpack.c.l.b16 %v402
        %v1018 = vunpack.c.h.b16 %v402
        %v1019 = vunpack.c.l.b16 %v403
        %v1020 = vunpack.c.h.b16 %v403
        %v1021 = vunpack.c.l.b16 %v404
        %v1022 = vunpack.c.h.b16 %v404
        %v1023 = vunpack.c.l.b16 %v405
        %v1024 = vunpack.c.h.b16 %v405
        %v1025 = vunpack.c.l.b16 %v406
        %v1026 = vunpack.c.h.b16 %v406
        %v1027 = vunpack.c.l.b16 %v407
        %v1028 = vunpack.c.h.b16 %v407
        %v1029 = vunpack.c.l.b16 %v408
        %v1030 = vunpack.c.h.b16 %v408
        %v1031 = vunpack.c.l.b16 %v409
        %v1032 = vunpack.c.h.b16 %v409
        %v1033 = vunpack.c.l.b16 %v410
        %v1034 = vunpack.c.h.b16 %v410
        %v1035 = vunpack.c.l.b16 %v411
        %v1036 = vunpack.c.h.b16 %v411
        %v1037 = vunpack.c.l.b16 %v412
        %v1038 = vunpack.c.h.b16 %v412
        %v1039 = vunpack.c.l.b16 %v413
        %v1040 = vunpack.c.h.b16 %v413
        %v1041 = vunpack.c.l.b16 %v414
        %v1042 = vunpack.c.h.b16 %v414
        %v1043 = vunpack.c.l.b16 %v415
        %v1044 = vunpack.c.h.b16 %v415
        %v1045 = vunpack.c.l.b16 %v416
        %v1046 = vunpack.c.h.b16 %v416
        %v1047 = vunpack.c.l.b16 %v417
        %v1048 = vunpack.c.h.b16 %v417
        %v1049 = vunpack.c.l.b16 %v418
        %v1050 = vunpack.c.h.b16 %v418
        %v1051 = vunpack.c.l.b16 %v419
        %v1052 = vunpack.c.h.b16 %v419
        %v1053 = vunpack.c.l.b16 %v420
        %v1054 = vunpack.c.h.b16 %v420
        %v1055 = vunpack.c.l.b16 %v421
        %v1056 = vunpack.c.h.b16 %v421
        %v1057 = vunpack.c.l.b16 %v422
        %v1058 = vunpack.c.h.b16 %v422
        %v1059 = vunpack.c.l.b16 %v423
        %v1060 = vunpack.c.h.b16 %v423
        %v1061 = vunpack.c.l.b16 %v424
        %v1062 = vunpack.c.h.b16 %v424
        %v1063 = vunpack.c.l.b16 %v425
        %v1064 = vunpack.c.h.b16 %v425
        %v1065 = vunpack.c.l.b16 %v426
        %v1066 = vunpack.c.h.b16 %v426
        %v1067 = vunpack.c.l.b16 %v427
        %v1068 = vunpack.c.h.b16 %v427
        %v1069 = vunpack.c.l.b16 %v428
        %v1070 = vunpack.c.h.b16 %v428
        %v1071 = vunpack.c.l.b16 %v429
        %v1072 = vunpack.c.h.b16 %v429
        %v1073 = vunpack.c.l.b16 %v430
        %v1074 = vunpack.c.h.b16 %v430
        %v1075 = vunpack.c.l.b16 %v431
        %v1076 = vunpack.c.h.b16 %v431
        %v1077 = vunpack.c.l.b16 %v432
        %v1078 = vunpack.c.h.b16 %v432
        %v1079 = vunpack.c.l.b16 %v433
        %v1080 = vunpack.c.h.b16 %v433
        %v1081 = vunpack.c.l.b16 %v434
        %v1082 = vunpack.c.h.b16 %v434
        %v1083 = vunpack.c.l.b16 %v435
        %v1084 = vunpack.c.h.b16 %v435
        %v1085 = vunpack.c.l.b16 %v436
        %v1086 = vunpack.c.h.b16 %v436
        %v1087 = vunpack.c.l.b16 %v437
        %v1088 = vunpack.c.h.b16 %v437
        %v1089 = vunpack.c.l.b16 %v438
        %v1090 = vunpack.c.h.b16 %v438
        %v1091 = vunpack.c.l.b16 %v439
        %v1092 = vunpack.c.h.b16 %v439
        %v1093 = vunpack.c.l.b16 %v440
        %v1094 = vunpack.c.h.b16 %v440
        %v1095 = vunpack.c.l.b16 %v441
        %v1096 = vunpack.c.h.b16 %v441
        %v1097 = vunpack.c.l.b16 %v442
        %v1098 = vunpack.c.h.b16 %v442
        %v1099 = vunpack.c.l.b16 %v443
        %v1100 = vunpack.c.h.b16 %v443
        %v1101 = vunpack.c.l.b16 %v444
        %v1102 = vunpack.c.h.b16 %v444
        %v1103 = vunpack.c.l.b16 %v445
        %v1104 = vunpack.c.h.b16 %v445
        %v1105 = vunpack.c.l.b16 %v446
        %v1106 = vunpack.c.h.b16 %v446
        %v1107 = vunpack.c.l.b16 %v447
        %v1108 = vunpack.c.h.b16 %v447
        %v1109 = vunpack.c.l.b16 %v448
        %v1110 = vunpack.c.h.b16 %v448
        %v1111 = vunpack.c.l.b16 %v449
        %v1112 = vunpack.c.h.b16 %v449
        %v1113 = vunpack.c.l.b16 %v450
        %v1114 = vunpack.c.h.b16 %v450
        %v1115 = vunpack.c.l.b16 %v451
        %v1116 = vunpack.c.h.b16 %v451
        %v1117 = vunpack.c.l.b16 %v452
        %v1118 = vunpack.c.h.b16 %v452
        %v1119 = vunpack.c.l.b16 %v453
        %v1120 = vunpack.c.h.b16 %v453
        %v1121 = vunpack.c.l.b16 %v454
        %v1122 = vunpack.c.h.b16 %v454
        %v1123 = vunpack.c.l.b16 %v455
        %v1124 = vunpack.c.h.b16 %v455
        %v1125 = vunpack.c.l.b16 %v456
        %v1126 = vunpack.c.h.b16 %v456
        %v1127 = vunpack.c.l.b16 %v457
        %v1128 = vunpack.c.h.b16 %v457
        %v1129 = vunpack.c.l.b16 %v458
        %v1130 = vunpack.c.h.b16 %v458
        %v1131 = vunpack.c.l.b16 %v459
        %v1132 = vunpack.c.h.b16 %v459
        %v1133 = vunpack.c.l.b16 %v460
        %v1134 = vunpack.c.h.b16 %v460
        %v1135 = vunpack.c.l.b16 %v461
        %v1136 = vunpack.c.h.b16 %v461
        %v1137 = vunpack.c.l.b16 %v462
        %v1138 = vunpack.c.h.b16 %v462
        %v1139 = vunpack.c.l.b16 %v463
        %v1140 = vunpack.c.h.b16 %v463
        %v1141 = vunpack.c.l.b16 %v464
        %v1142 = vunpack.c.h.b16 %v464
        %v1143 = vunpack.c.l.b16 %v465
        %v1144 = vunpack.c.h.b16 %v465
        %v1145 = vunpack.c.l.b16 %v466
        %v1146 = vunpack.c.h.b16 %v466
        %v1147 = vunpack.c.l.b16 %v467
        %v1148 = vunpack.c.h.b16 %v467
        %v1149 = vunpack.c.l.b16 %v468
        %v1150 = vunpack.c.h.b16 %v468
        %v1151 = vunpack.c.l.b16 %v469
        %v1152 = vunpack.c.h.b16 %v469
        %v1153 = vunpack.c.l.b16 %v470
        %v1154 = vunpack.c.h.b16 %v470
        %v1155 = vunpack.c.l.b16 %v471
        %v1156 = vunpack.c.h.b16 %v471
        %v1157 = vunpack.c.l.b16 %v472
        %v1158 = vunpack.c.h.b16 %v472
        %v1159 = vunpack.c.l.b16 %v473
        %v1160 = vunpack.c.h.b16 %v473
        %v1161 = vunpack.c.l.b16 %v474
        %v1162 = vunpack.c.h.b16 %v474
        %v1163 = vunpack.c.l.b16 %v475
        %v1164 = vunpack.c.h.b16 %v475
        %v1165 = vunpack.c.l.b16 %v476
        %v1166 = vunpack.c.h.b16 %v476
        %v1167 = vunpack.c.l.b16 %v477
        %v1168 = vunpack.c.h.b16 %v477
        %v1169 = vunpack.c.l.b16 %v478
        %v1170 = vunpack.c.h.b16 %v478
        %v1171 = vunpack.c.l.b16 %v479
        %v1172 = vunpack.c.h.b16 %v479
        %v1173 = vunpack.c.l.b16 %v480
        %v1174 = vunpack.c.h.b16 %v480
        %v1175 = vunpack.c.l.b16 %v481
        %v1176 = vunpack.c.h.b16 %v481
        %v1177 = vunpack.c.l.b16 %v482
        %v1178 = vunpack.c.h.b16 %v482
        %v1179 = vunpack.c.l.b16 %v483
        %v1180 = vunpack.c.h.b16 %v483
        %v1181 = vunpack.c.l.b16 %v484
        %v1182 = vunpack.c.h.b16 %v484
        %v1183 = vunpack.c.l.b16 %v485
        %v1184 = vunpack.c.h.b16 %v485
        %v1185 = vunpack.c.l.b16 %v486
        %v1186 = vunpack.c.h.b16 %v486
        %v1187 = vunpack.c.l.b16 %v487
        %v1188 = vunpack.c.h.b16 %v487
        %v1189 = vunpack.c.l.b16 %v488
        %v1190 = vunpack.c.h.b16 %v488
        %v1191 = vunpack.c.l.b16 %v489
        %v1192 = vunpack.c.h.b16 %v489
        %v1193 = vunpack.c.l.b16 %v490
        %v1194 = vunpack.c.h.b16 %v490
        %v1195 = vunpack.c.l.b16 %v491
        %v1196 = vunpack.c.h.b16 %v491
        %v1197 = vunpack.c.l.b16 %v492
        %v1198 = vunpack.c.h.b16 %v492
        %v1199 = vunpack.c.l.b16 %v493
        %v1200 = vunpack.c.h.b16 %v493
        %v1201 = vunpack.c.l.b16 %v494
        %v1202 = vunpack.c.h.b16 %v494
        %v1203 = vunpack.c.l.b16 %v495
        %v1204 = vunpack.c.h.b16 %v495
        %v1205 = vunpack.c.l.b16 %v496
        %v1206 = vunpack.c.h.b16 %v496
        %v1207 = vunpack.c.l.b16 %v497
        %v1208 = vunpack.c.h.b16 %v497
        %v1209 = vunpack.c.l.b16 %v498
        %v1210 = vunpack.c.h.b16 %v498
        %v1211 = vunpack.c.l.b16 %v499
        %v1212 = vunpack.c.h.b16 %v499
        %v1213 = vunpack.c.l.b16 %v500
        %v1214 = vunpack.c.h.b16 %v500
        %v1215 = vunpack.c.l.b16 %v501
        %v1216 = vunpack.c.h.b16 %v501
        %v1217 = vunpack.c.l.b16 %v502
        %v1218 = vunpack.c.h.b16 %v502
        %v1219 = vunpack.c.l.b16 %v503
        %v1220 = vunpack.c.h.b16 %v503
        %v1221 = vunpack.c.l.b16 %v504
        %v1222 = vunpack.c.h.b16 %v504
        %v1223 = vunpack.c.l.b16 %v505
        %v1224 = vunpack.c.h.b16 %v505
        %v1225 = vpack.c.b16 %v781, %v777
        %v1226 = vpack.c.b16 %v782, %v778
        %v1227 = vpack.c.b16 %v783, %v779
        %v1228 = vpack.c.b16 %v784, %v780
        %v1229 = vpack.c.b16 %v789, %v785
        %v1230 = vpack.c.b16 %v790, %v786
        %v1231 = vpack.c.b16 %v791, %v787
        %v1232 = vpack.c.b16 %v792, %v788
        %v1233 = vpack.c.b16 %v797, %v793
        %v1234 = vpack.c.b16 %v798, %v794
        %v1235 = vpack.c.b16 %v799, %v795
        %v1236 = vpack.c.b16 %v800, %v796
        %v1237 = vpack.c.b16 %v805, %v801
        %v1238 = vpack.c.b16 %v806, %v802
        %v1239 = vpack.c.b16 %v807, %v803
        %v1240 = vpack.c.b16 %v808, %v804
        %v1241 = vpack.c.b16 %v813, %v809
        %v1242 = vpack.c.b16 %v814, %v810
        %v1243 = vpack.c.b16 %v815, %v811
        %v1244 = vpack.c.b16 %v816, %v812
        %v1245 = vpack.c.b16 %v821, %v817
        %v1246 = vpack.c.b16 %v822, %v818
        %v1247 = vpack.c.b16 %v823, %v819
        %v1248 = vpack.c.b16 %v824, %v820
        %v1249 = vpack.c.b16 %v829, %v825
        %v1250 = vpack.c.b16 %v830, %v826
        %v1251 = vpack.c.b16 %v831, %v827
        %v1252 = vpack.c.b16 %v832, %v828
        %v1253 = vpack.c.b16 %v837, %v833
        %v1254 = vpack.c.b16 %v838, %v834
        %v1255 = vpack.c.b16 %v839, %v835
        %v1256 = vpack.c.b16 %v840, %v836
        %v1257 = vpack.c.b16 %v845, %v841
        %v1258 = vpack.c.b16 %v846, %v842
        %v1259 = vpack.c.b16 %v847, %v843
        %v1260 = vpack.c.b16 %v848, %v844
        %v1261 = vpack.c.b16 %v853, %v849
        %v1262 = vpack.c.b16 %v854, %v850
        %v1263 = vpack.c.b16 %v855, %v851
        %v1264 = vpack.c.b16 %v856, %v852
        %v1265 = vpack.c.b16 %v861, %v857
        %v1266 = vpack.c.b16 %v862, %v858
        %v1267 = vpack.c.b16 %v863, %v859
        %v1268 = vpack.c.b16 %v864, %v860
        %v1269 = vpack.c.b16 %v869, %v865
        %v1270 = vpack.c.b16 %v870, %v866
        %v1271 = vpack.c.b16 %v871, %v867
        %v1272 = vpack.c.b16 %v872, %v868
        %v1273 = vpack.c.b16 %v877, %v873
        %v1274 = vpack.c.b16 %v878, %v874
        %v1275 = vpack.c.b16 %v879, %v875
        %v1276 = vpack.c.b16 %v880, %v876
        %v1277 = vpack.c.b16 %v885, %v881
        %v1278 = vpack.c.b16 %v886, %v882
        %v1279 = vpack.c.b16 %v887, %v883
        %v1280 = vpack.c.b16 %v888, %v884
        %v1281 = vpack.c.b16 %v893, %v889
        %v1282 = vpack.c.b16 %v894, %v890
        %v1283 = vpack.c.b16 %v895, %v891
        %v1284 = vpack.c.b16 %v896, %v892
        %v1285 = vpack.c.b16 %v901, %v897
        %v1286 = vpack.c.b16 %v902, %v898
        %v1287 = vpack.c.b16 %v903, %v899
        %v1288 = vpack.c.b16 %v904, %v900
        %v1289 = vpack.c.b16 %v909, %v905
        %v1290 = vpack.c.b16 %v910, %v906
        %v1291 = vpack.c.b16 %v911, %v907
        %v1292 = vpack.c.b16 %v912, %v908
        %v1293 = vpack.c.b16 %v917, %v913
        %v1294 = vpack.c.b16 %v918, %v914
        %v1295 = vpack.c.b16 %v919, %v915
        %v1296 = vpack.c.b16 %v920, %v916
        %v1297 = vpack.c.b16 %v925, %v921
        %v1298 = vpack.c.b16 %v926, %v922
        %v1299 = vpack.c.b16 %v927, %v923
        %v1300 = vpack.c.b16 %v928, %v924
        %v1301 = vpack.c.b16 %v933, %v929
        %v1302 = vpack.c.b16 %v934, %v930
        %v1303 = vpack.c.b16 %v935, %v931
        %v1304 = vpack.c.b16 %v936, %v932
        %v1305 = vpack.c.b16 %v941, %v937
        %v1306 = vpack.c.b16 %v942, %v938
        %v1307 = vpack.c.b16 %v943, %v939
        %v1308 = vpack.c.b16 %v944, %v940
        %v1309 = vpack.c.b16 %v949, %v945
        %v1310 = vpack.c.b16 %v950, %v946
        %v1311 = vpack.c.b16 %v951, %v947
        %v1312 = vpack.c.b16 %v952, %v948
        %v1313 = vpack.c.b16 %v957, %v953
        %v1314 = vpack.c.b16 %v958, %v954
        %v1315 = vpack.c.b16 %v959, %v955
        %v1316 = vpack.c.b16 %v960, %v956
        %v1317 = vpack.c.b16 %v965, %v961
        %v1318 = vpack.c.b16 %v966, %v962
        %v1319 = vpack.c.b16 %v967, %v963
        %v1320 = vpack.c.b16 %v968, %v964
        %v1321 = vpack.c.b16 %v973, %v969
        %v1322 = vpack.c.b16 %v974, %v970
        %v1323 = vpack.c.b16 %v975, %v971
        %v1324 = vpack.c.b16 %v976, %v972
        %v1325 = vpack.c.b16 %v981, %v977
        %v1326 = vpack.c.b16 %v982, %v978
        %v1327 = vpack.c.b16 %v983, %v979
        %v1328 = vpack.c.b16 %v984, %v980
        %v1329 = vpack.c.b16 %v989, %v985
        %v1330 = vpack.c.b16 %v990, %v986
        %v1331 = vpack.c.b16 %v991, %v987
        %v1332 = vpack.c.b16 %v992, %v988
        %v1333 = vpack.c.b16 %v997, %v993
        %v1334 = vpack.c.b16 %v998, %v994
        %v1335 = vpack.c.b16 %v999, %v995
        %v1336 = vpack.c.b16 %v1000, %v996
        %v1337 = vpack.c.b16 %v1005, %v1001
        %v1338 = vpack.c.b16 %v1006, %v1002
        %v1339 = vpack.c.b16 %v1007, %v1003
        %v1340 = vpack.c.b16 %v1008, %v1004
        %v1341 = vpack.c.b16 %v1013, %v1009
        %v1342 = vpack.c.b16 %v1014, %v1010
        %v1343 = vpack.c.b16 %v1015, %v1011
        %v1344 = vpack.c.b16 %v1016, %v1012
        %v1345 = vpack.c.b16 %v1021, %v1017
        %v1346 = vpack.c.b16 %v1022, %v1018
        %v1347 = vpack.c.b16 %v1023, %v1019
        %v1348 = vpack.c.b16 %v1024, %v1020
        %v1349 = vpack.c.b16 %v1029, %v1025
        %v1350 = vpack.c.b16 %v1030, %v1026
        %v1351 = vpack.c.b16 %v1031, %v1027
        %v1352 = vpack.c.b16 %v1032, %v1028
        %v1353 = vpack.c.b16 %v1037, %v1033
        %v1354 = vpack.c.b16 %v1038, %v1034
        %v1355 = vpack.c.b16 %v1039, %v1035
        %v1356 = vpack.c.b16 %v1040, %v1036
        %v1357 = vpack.c.b16 %v1045, %v1041
        %v1358 = vpack.c.b16 %v1046, %v1042
        %v1359 = vpack.c.b16 %v1047, %v1043
        %v1360 = vpack.c.b16 %v1048, %v1044
        %v1361 = vpack.c.b16 %v1053, %v1049
        %v1362 = vpack.c.b16 %v1054, %v1050
        %v1363 = vpack.c.b16 %v1055, %v1051
        %v1364 = vpack.c.b16 %v1056, %v1052
        %v1365 = vpack.c.b16 %v1061, %v1057
        %v1366 = vpack.c.b16 %v1062, %v1058
        %v1367 = vpack.c.b16 %v1063, %v1059
        %v1368 = vpack.c.b16 %v1064, %v1060
        %v1369 = vpack.c.b16 %v1069, %v1065
        %v1370 = vpack.c.b16 %v1070, %v1066
        %v1371 = vpack.c.b16 %v1071, %v1067
        %v1372 = vpack.c.b16 %v1072, %v1068
        %v1373 = vpack.c.b16 %v1077, %v1073
        %v1374 = vpack.c.b16 %v1078, %v1074
        %v1375 = vpack.c.b16 %v1079, %v1075
        %v1376 = vpack.c.b16 %v1080, %v1076
        %v1377 = vpack.c.b16 %v1085, %v1081
        %v1378 = vpack.c.b16 %v1086, %v1082
        %v1379 = vpack.c.b16 %v1087, %v1083
        %v1380 = vpack.c.b16 %v1088, %v1084
        %v1381 = vpack.c.b16 %v1093, %v1089
        %v1382 = vpack.c.b16 %v1094, %v1090
        %v1383 = vpack.c.b16 %v1095, %v1091
        %v1384 = vpack.c.b16 %v1096, %v1092
        %v1385 = vpack.c.b16 %v1101, %v1097
        %v1386 = vpack.c.b16 %v1102, %v1098
        %v1387 = vpack.c.b16 %v1103, %v1099
        %v1388 = vpack.c.b16 %v1104, %v1100
        %v1389 = vpack.c.b16 %v1109, %v1105
        %v1390 = vpack.c.b16 %v1110, %v1106
        %v1391 = vpack.c.b16 %v1111, %v1107
        %v1392 = vpack.c.b16 %v1112, %v1108
        %v1393 = vpack.c.b16 %v1117, %v1113
        %v1394 = vpack.c.b16 %v1118, %v1114
        %v1395 = vpack.c.b16 %v1119, %v1115
        %v1396 = vpack.c.b16 %v1120, %v1116
        %v1397 = vpack.c.b16 %v1125, %v1121
        %v1398 = vpack.c.b16 %v1126, %v1122
        %v1399 = vpack.c.b16 %v1127, %v1123
        %v1400 = vpack.c.b16 %v1128, %v1124
        %v1401 = vpack.c.b16 %v1133, %v1129
        %v1402 = vpack.c.b16 %v1134, %v1130
        %v1403 = vpack.c.b16 %v1135, %v1131
        %v1404 = vpack.c.b16 %v1136, %v1132
        %v1405 = vpack.c.b16 %v1141, %v1137
        %v1406 = vpack.c.b16 %v1142, %v1138
        %v1407 = vpack.c.b16 %v1143, %v1139
        %v1408 = vpack.c.b16 %v1144, %v1140
        %v1409 = vpack.c.b16 %v1149, %v1145
        %v1410 = vpack.c.b16 %v1150, %v1146
        %v1411 = vpack.c.b16 %v1151, %v1147
        %v1412 = vpack.c.b16 %v1152, %v1148
        %v1413 = vpack.c.b16 %v1157, %v1153
        %v1414 = vpack.c.b16 %v1158, %v1154
        %v1415 = vpack.c.b16 %v1159, %v1155
        %v1416 = vpack.c.b16 %v1160, %v1156
        %v1417 = vpack.c.b16 %v1165, %v1161
        %v1418 = vpack.c.b16 %v1166, %v1162
        %v1419 = vpack.c.b16 %v1167, %v1163
        %v1420 = vpack.c.b16 %v1168, %v1164
        %v1421 = vpack.c.b16 %v1173, %v1169
        %v1422 = vpack.c.b16 %v1174, %v1170
        %v1423 = vpack.c.b16 %v1175, %v1171
        %v1424 = vpack.c.b16 %v1176, %v1172
        %v1425 = vpack.c.b16 %v1181, %v1177
        %v1426 = vpack.c.b16 %v1182, %v1178
        %v1427 = vpack.c.b16 %v1183, %v1179
        %v1428 = vpack.c.b16 %v1184, %v1180
        %v1429 = vpack.c.b16 %v1189, %v1185
        %v1430 = vpack.c.b16 %v1190, %v1186
        %v1431 = vpack.c.b16 %v1191, %v1187
        %v1432 = vpack.c.b16 %v1192, %v1188
        %v1433 = vpack.c.b16 %v1197, %v1193
        %v1434 = vpack.c.b16 %v1198, %v1194
        %v1435 = vpack.c.b16 %v1199, %v1195
        %v1436 = vpack.c.b16 %v1200, %v1196
        %v1437 = vpack.c.b16 %v1205, %v1201
        %v1438 = vpack.c.b16 %v1206, %v1202
        %v1439 = vpack.c.b16 %v1207, %v1203
        %v1440 = vpack.c.b16 %v1208, %v1204
        %v1441 = vpack.c.b16 %v1213, %v1209
        %v1442 = vpack.c.b16 %v1214, %v1210
        %v1443 = vpack.c.b16 %v1215, %v1211
        %v1444 = vpack.c.b16 %v1216, %v1212
        %v1445 = vpack.c.b16 %v1221, %v1217
        %v1446 = vpack.c.b16 %v1222, %v1218
        %v1447 = vpack.c.b16 %v1223, %v1219
        %v1448 = vpack.c.b16 %v1224, %v1220
        %1673 = vmatprep.subr.bf16.mxu0 %v1226
        %1674 = vmatpush1.bf16.msra.mxu0 %v1225
        %1675 = vmatprep.subr.bf16.mxu0 %v1230
        %1676 = vmatpush1.bf16.msra.mxu0 %v1229
        %1677 = vmatprep.subr.bf16.mxu0 %v1234
        %1678 = vmatpush1.bf16.msra.mxu0 %v1233
        %1679 = vmatprep.subr.bf16.mxu0 %v1238
        %1680 = vmatpush1.bf16.msra.mxu0 %v1237
        %1681 = vmatprep.subr.bf16.mxu0 %v1242
        %1682 = vmatpush1.bf16.msra.mxu0 %v1241
        %1683 = vmatprep.subr.bf16.mxu0 %v1246
        %1684 = vmatpush1.bf16.msra.mxu0 %v1245
        %1685 = vmatprep.subr.bf16.mxu0 %v1250
        %1686 = vmatpush1.bf16.msra.mxu0 %v1249
        %1687 = vmatprep.subr.bf16.mxu0 %v1254
        %1688 = vmatpush1.bf16.msra.mxu0 %v1253
        %1689 = vmatprep.subr.bf16.mxu0 %v1258
        %1690 = vmatpush1.bf16.msra.mxu0 %v1257
        %1691 = vmatprep.subr.bf16.mxu0 %v1262
        %1692 = vmatpush1.bf16.msra.mxu0 %v1261
        %1693 = vmatprep.subr.bf16.mxu0 %v1266
        %1694 = vmatpush1.bf16.msra.mxu0 %v1265
        %1695 = vmatprep.subr.bf16.mxu0 %v1270
        %1696 = vmatpush1.bf16.msra.mxu0 %v1269
        %1697 = vmatprep.subr.bf16.mxu0 %v1274
        %1698 = vmatpush1.bf16.msra.mxu0 %v1273
        %1699 = vmatprep.subr.bf16.mxu0 %v1278
        %1700 = vmatpush1.bf16.msra.mxu0 %v1277
        %1701 = vmatprep.subr.bf16.mxu0 %v1282
        %1702 = vmatpush1.bf16.msra.mxu0 %v1281
        %1703 = vmatprep.subr.bf16.mxu0 %v1286
        %1704 = vmatpush1.bf16.msra.mxu0 %v1285
        %1705 = vmatprep.mubr.bf16.mxu0 %v540
        %1706 = vmatmul.mubr.bf16.gmra.mrb[0].mxu0 %v539
        %v1707 = vpop.f32.mrb[0].mxu0
        %v1708 = vadd.f32 %v511, %v1707
        %v1709 = vpop.f32.mrb[0].mxu0
        %v1710 = vadd.f32 %v515, %v1709
        %v1711 = vpop.f32.mrb[0].mxu0
        %v1712 = vpop.f32.mrb[0].mxu0
        %1713 = vdwg.mxu0
        %1714 = vmatprep.subr.bf16.mxu0 %v1290
        %1715 = vmatpush1.bf16.msra.mxu0 %v1289
        %1716 = vmatprep.subr.bf16.mxu0 %v1294
        %1717 = vmatpush1.bf16.msra.mxu0 %v1293
        %1718 = vmatprep.subr.bf16.mxu0 %v1298
        %1719 = vmatpush1.bf16.msra.mxu0 %v1297
        %1720 = vmatprep.subr.bf16.mxu0 %v1302
        %1721 = vmatpush1.bf16.msra.mxu0 %v1301
        %1722 = vmatprep.subr.bf16.mxu0 %v1306
        %1723 = vmatpush1.bf16.msra.mxu0 %v1305
        %1724 = vmatprep.subr.bf16.mxu0 %v1310
        %1725 = vmatpush1.bf16.msra.mxu0 %v1309
        %1726 = vmatprep.subr.bf16.mxu0 %v1314
        %1727 = vmatpush1.bf16.msra.mxu0 %v1313
        %1728 = vmatprep.subr.bf16.mxu0 %v1318
        %1729 = vmatpush1.bf16.msra.mxu0 %v1317
        %1730 = vmatprep.subr.bf16.mxu0 %v1322
        %1731 = vmatpush1.bf16.msra.mxu0 %v1321
        %1732 = vmatprep.subr.bf16.mxu0 %v1326
        %1733 = vmatpush1.bf16.msra.mxu0 %v1325
        %1734 = vmatprep.subr.bf16.mxu0 %v1330
        %1735 = vmatpush1.bf16.msra.mxu0 %v1329
        %1736 = vmatprep.subr.bf16.mxu0 %v1334
        %1737 = vmatpush1.bf16.msra.mxu0 %v1333
        %1738 = vmatprep.subr.bf16.mxu0 %v1338
        %1739 = vmatpush1.bf16.msra.mxu0 %v1337
        %1740 = vmatprep.subr.bf16.mxu0 %v1342
        %1741 = vmatpush1.bf16.msra.mxu0 %v1341
        %1742 = vmatprep.subr.bf16.mxu0 %v1346
        %1743 = vmatpush1.bf16.msra.mxu0 %v1345
        %1744 = vmatprep.subr.bf16.mxu0 %v1350
        %1745 = vmatpush1.bf16.msra.mxu0 %v1349
        %1746 = vmatprep.mubr.bf16.mxu0 %v542
        %1747 = vmatmul.mubr.bf16.gmra.mrb[0].mxu0 %v541
        %v1748 = vpop.f32.mrb[0].mxu0
        %v1749 = vadd.f32 %v1708, %v1748
        %v1750 = vpop.f32.mrb[0].mxu0
        %v1751 = vadd.f32 %v1710, %v1750
        %v1752 = vpop.f32.mrb[0].mxu0
        %v1753 = vpop.f32.mrb[0].mxu0
        %1754 = vdwg.mxu0
        %1755 = vmatprep.subr.bf16.mxu0 %v1354
        %1756 = vmatpush1.bf16.msra.mxu0 %v1353
        %1757 = vmatprep.subr.bf16.mxu0 %v1358
        %1758 = vmatpush1.bf16.msra.mxu0 %v1357
        %1759 = vmatprep.subr.bf16.mxu0 %v1362
        %1760 = vmatpush1.bf16.msra.mxu0 %v1361
        %1761 = vmatprep.subr.bf16.mxu0 %v1366
        %1762 = vmatpush1.bf16.msra.mxu0 %v1365
        %1763 = vmatprep.subr.bf16.mxu0 %v1370
        %1764 = vmatpush1.bf16.msra.mxu0 %v1369
        %1765 = vmatprep.subr.bf16.mxu0 %v1374
        %1766 = vmatpush1.bf16.msra.mxu0 %v1373
        %1767 = vmatprep.subr.bf16.mxu0 %v1378
        %1768 = vmatpush1.bf16.msra.mxu0 %v1377
        %1769 = vmatprep.subr.bf16.mxu0 %v1382
        %1770 = vmatpush1.bf16.msra.mxu0 %v1381
        %1771 = vmatprep.subr.bf16.mxu0 %v1386
        %1772 = vmatpush1.bf16.msra.mxu0 %v1385
        %1773 = vmatprep.subr.bf16.mxu0 %v1390
        %1774 = vmatpush1.bf16.msra.mxu0 %v1389
        %1775 = vmatprep.subr.bf16.mxu0 %v1394
        %1776 = vmatpush1.bf16.msra.mxu0 %v1393
        %1777 = vmatprep.subr.bf16.mxu0 %v1398
        %1778 = vmatpush1.bf16.msra.mxu0 %v1397
        %1779 = vmatprep.subr.bf16.mxu0 %v1402
        %1780 = vmatpush1.bf16.msra.mxu0 %v1401
        %1781 = vmatprep.subr.bf16.mxu0 %v1406
        %1782 = vmatpush1.bf16.msra.mxu0 %v1405
        %1783 = vmatprep.subr.bf16.mxu0 %v1410
        %1784 = vmatpush1.bf16.msra.mxu0 %v1409
        %1785 = vmatprep.subr.bf16.mxu0 %v1414
        %1786 = vmatpush1.bf16.msra.mxu0 %v1413
        %1787 = vmatprep.mubr.bf16.mxu0 %v544
        %1788 = vmatmul.mubr.bf16.gmra.mrb[0].mxu0 %v543
        %v1789 = vpop.f32.mrb[0].mxu0
        %v1790 = vadd.f32 %v1749, %v1789
        %v1791 = vpop.f32.mrb[0].mxu0
        %v1792 = vadd.f32 %v1751, %v1791
        %v1793 = vpop.f32.mrb[0].mxu0
        %v1794 = vpop.f32.mrb[0].mxu0
        %1795 = vdwg.mxu0
        %1796 = vmatprep.subr.bf16.mxu0 %v1418
        %1797 = vmatpush1.bf16.msra.mxu0 %v1417
        %1798 = vmatprep.subr.bf16.mxu0 %v1422
        %1799 = vmatpush1.bf16.msra.mxu0 %v1421
        %1800 = vmatprep.subr.bf16.mxu0 %v1426
        %1801 = vmatpush1.bf16.msra.mxu0 %v1425
        %1802 = vmatprep.subr.bf16.mxu0 %v1430
        %1803 = vmatpush1.bf16.msra.mxu0 %v1429
        %1804 = vmatprep.subr.bf16.mxu0 %v1434
        %1805 = vmatpush1.bf16.msra.mxu0 %v1433
        %1806 = vmatprep.subr.bf16.mxu0 %v1438
        %1807 = vmatpush1.bf16.msra.mxu0 %v1437
        %1808 = vmatprep.subr.bf16.mxu0 %v1442
        %1809 = vmatpush1.bf16.msra.mxu0 %v1441
        %1810 = vmatprep.subr.bf16.mxu0 %v1446
        %1811 = vmatpush1.bf16.msra.mxu0 %v1445
        %1812 = vmatprep.subr.bf16.mxu0 0
        %1813 = vmatpush1.bf16.msra.mxu0 0
        %1814 = vmatprep.subr.bf16.mxu0 0
        %1815 = vmatpush1.bf16.msra.mxu0 0
        %1816 = vmatprep.subr.bf16.mxu0 0
        %1817 = vmatpush1.bf16.msra.mxu0 0
        %1818 = vmatprep.subr.bf16.mxu0 0
        %1819 = vmatpush1.bf16.msra.mxu0 0
        %1820 = vmatprep.subr.bf16.mxu0 0
        %1821 = vmatpush1.bf16.msra.mxu0 0
        %1822 = vmatprep.subr.bf16.mxu0 0
        %1823 = vmatpush1.bf16.msra.mxu0 0
        %1824 = vmatprep.subr.bf16.mxu0 0
        %1825 = vmatpush1.bf16.msra.mxu0 0
        %1826 = vmatprep.subr.bf16.mxu0 0
        %1827 = vmatpush1.bf16.msra.mxu0 0
        %1828 = vmatprep.mubr.bf16.mxu0 0
        %1829 = vmatmul.mubr.bf16.gmra.mrb[0].mxu0 %v545
        %v1830 = vpop.f32.mrb[0].mxu0
        %v1831 = vadd.f32 %v1790, %v1830
        %v1832 = vpop.f32.mrb[0].mxu0
        %v1833 = vadd.f32 %v1792, %v1832
        %v1834 = vpop.f32.mrb[0].mxu0
        %v1835 = vpop.f32.mrb[0].mxu0
        %1836 = vdwg.mxu0
        %1837 = vmatprep.subr.bf16.mxu0 %v1228
        %1838 = vmatpush1.bf16.msra.mxu0 %v1227
        %1839 = vmatprep.subr.bf16.mxu0 %v1232
        %1840 = vmatpush1.bf16.msra.mxu0 %v1231
        %1841 = vmatprep.subr.bf16.mxu0 %v1236
        %1842 = vmatpush1.bf16.msra.mxu0 %v1235
        %1843 = vmatprep.subr.bf16.mxu0 %v1240
        %1844 = vmatpush1.bf16.msra.mxu0 %v1239
        %1845 = vmatprep.subr.bf16.mxu0 %v1244
        %1846 = vmatpush1.bf16.msra.mxu0 %v1243
        %1847 = vmatprep.subr.bf16.mxu0 %v1248
        %1848 = vmatpush1.bf16.msra.mxu0 %v1247
        %1849 = vmatprep.subr.bf16.mxu0 %v1252
        %1850 = vmatpush1.bf16.msra.mxu0 %v1251
        %1851 = vmatprep.subr.bf16.mxu0 %v1256
        %1852 = vmatpush1.bf16.msra.mxu0 %v1255
        %1853 = vmatprep.subr.bf16.mxu0 %v1260
        %1854 = vmatpush1.bf16.msra.mxu0 %v1259
        %1855 = vmatprep.subr.bf16.mxu0 %v1264
        %1856 = vmatpush1.bf16.msra.mxu0 %v1263
        %1857 = vmatprep.subr.bf16.mxu0 %v1268
        %1858 = vmatpush1.bf16.msra.mxu0 %v1267
        %1859 = vmatprep.subr.bf16.mxu0 %v1272
        %1860 = vmatpush1.bf16.msra.mxu0 %v1271
        %1861 = vmatprep.subr.bf16.mxu0 %v1276
        %1862 = vmatpush1.bf16.msra.mxu0 %v1275
        %1863 = vmatprep.subr.bf16.mxu0 %v1280
        %1864 = vmatpush1.bf16.msra.mxu0 %v1279
        %1865 = vmatprep.subr.bf16.mxu0 %v1284
        %1866 = vmatpush1.bf16.msra.mxu0 %v1283
        %1867 = vmatprep.subr.bf16.mxu0 %v1288
        %1868 = vmatpush1.bf16.msra.mxu0 %v1287
        %1869 = vmatprep.mubr.bf16.mxu0 %v540
        %1870 = vmatmul.mubr.bf16.gmra.mrb[0].mxu0 %v539
        %v1871 = vpop.f32.mrb[0].mxu0
        %v1872 = vadd.f32 %v519, %v1871
        %v1873 = vpop.f32.mrb[0].mxu0
        %v1874 = vadd.f32 %v523, %v1873
        %v1875 = vpop.f32.mrb[0].mxu0
        %v1876 = vpop.f32.mrb[0].mxu0
        %1877 = vdwg.mxu0
        %1878 = vmatprep.subr.bf16.mxu0 %v1292
        %1879 = vmatpush1.bf16.msra.mxu0 %v1291
        %1880 = vmatprep.subr.bf16.mxu0 %v1296
        %1881 = vmatpush1.bf16.msra.mxu0 %v1295
        %1882 = vmatprep.subr.bf16.mxu0 %v1300
        %1883 = vmatpush1.bf16.msra.mxu0 %v1299
        %1884 = vmatprep.subr.bf16.mxu0 %v1304
        %1885 = vmatpush1.bf16.msra.mxu0 %v1303
        %1886 = vmatprep.subr.bf16.mxu0 %v1308
        %1887 = vmatpush1.bf16.msra.mxu0 %v1307
        %1888 = vmatprep.subr.bf16.mxu0 %v1312
        %1889 = vmatpush1.bf16.msra.mxu0 %v1311
        %1890 = vmatprep.subr.bf16.mxu0 %v1316
        %1891 = vmatpush1.bf16.msra.mxu0 %v1315
        %1892 = vmatprep.subr.bf16.mxu0 %v1320
        %1893 = vmatpush1.bf16.msra.mxu0 %v1319
        %1894 = vmatprep.subr.bf16.mxu0 %v1324
        %1895 = vmatpush1.bf16.msra.mxu0 %v1323
        %1896 = vmatprep.subr.bf16.mxu0 %v1328
        %1897 = vmatpush1.bf16.msra.mxu0 %v1327
        %1898 = vmatprep.subr.bf16.mxu0 %v1332
        %1899 = vmatpush1.bf16.msra.mxu0 %v1331
        %1900 = vmatprep.subr.bf16.mxu0 %v1336
        %1901 = vmatpush1.bf16.msra.mxu0 %v1335
        %1902 = vmatprep.subr.bf16.mxu0 %v1340
        %1903 = vmatpush1.bf16.msra.mxu0 %v1339
        %1904 = vmatprep.subr.bf16.mxu0 %v1344
        %1905 = vmatpush1.bf16.msra.mxu0 %v1343
        %1906 = vmatprep.subr.bf16.mxu0 %v1348
        %1907 = vmatpush1.bf16.msra.mxu0 %v1347
        %1908 = vmatprep.subr.bf16.mxu0 %v1352
        %1909 = vmatpush1.bf16.msra.mxu0 %v1351
        %1910 = vmatprep.mubr.bf16.mxu0 %v542
        %1911 = vmatmul.mubr.bf16.gmra.mrb[0].mxu0 %v541
        %v1912 = vpop.f32.mrb[0].mxu0
        %v1913 = vadd.f32 %v1872, %v1912
        %v1914 = vpop.f32.mrb[0].mxu0
        %v1915 = vadd.f32 %v1874, %v1914
        %v1916 = vpop.f32.mrb[0].mxu0
        %v1917 = vpop.f32.mrb[0].mxu0
        %1918 = vdwg.mxu0
        %1919 = vmatprep.subr.bf16.mxu0 %v1356
        %1920 = vmatpush1.bf16.msra.mxu0 %v1355
        %1921 = vmatprep.subr.bf16.mxu0 %v1360
        %1922 = vmatpush1.bf16.msra.mxu0 %v1359
        %1923 = vmatprep.subr.bf16.mxu0 %v1364
        %1924 = vmatpush1.bf16.msra.mxu0 %v1363
        %1925 = vmatprep.subr.bf16.mxu0 %v1368
        %1926 = vmatpush1.bf16.msra.mxu0 %v1367
        %1927 = vmatprep.subr.bf16.mxu0 %v1372
        %1928 = vmatpush1.bf16.msra.mxu0 %v1371
        %1929 = vmatprep.subr.bf16.mxu0 %v1376
        %1930 = vmatpush1.bf16.msra.mxu0 %v1375
        %1931 = vmatprep.subr.bf16.mxu0 %v1380
        %1932 = vmatpush1.bf16.msra.mxu0 %v1379
        %1933 = vmatprep.subr.bf16.mxu0 %v1384
        %1934 = vmatpush1.bf16.msra.mxu0 %v1383
        %1935 = vmatprep.subr.bf16.mxu0 %v1388
        %1936 = vmatpush1.bf16.msra.mxu0 %v1387
        %1937 = vmatprep.subr.bf16.mxu0 %v1392
        %1938 = vmatpush1.bf16.msra.mxu0 %v1391
        %1939 = vmatprep.subr.bf16.mxu0 %v1396
        %1940 = vmatpush1.bf16.msra.mxu0 %v1395
        %1941 = vmatprep.subr.bf16.mxu0 %v1400
        %1942 = vmatpush1.bf16.msra.mxu0 %v1399
        %1943 = vmatprep.subr.bf16.mxu0 %v1404
        %1944 = vmatpush1.bf16.msra.mxu0 %v1403
        %1945 = vmatprep.subr.bf16.mxu0 %v1408
        %1946 = vmatpush1.bf16.msra.mxu0 %v1407
        %1947 = vmatprep.subr.bf16.mxu0 %v1412
        %1948 = vmatpush1.bf16.msra.mxu0 %v1411
        %1949 = vmatprep.subr.bf16.mxu0 %v1416
        %1950 = vmatpush1.bf16.msra.mxu0 %v1415
        %1951 = vmatprep.mubr.bf16.mxu0 %v544
        %1952 = vmatmul.mubr.bf16.gmra.mrb[0].mxu0 %v543
        %v1953 = vpop.f32.mrb[0].mxu0
        %v1954 = vadd.f32 %v1913, %v1953
        %v1955 = vpop.f32.mrb[0].mxu0
        %v1956 = vadd.f32 %v1915, %v1955
        %v1957 = vpop.f32.mrb[0].mxu0
        %v1958 = vpop.f32.mrb[0].mxu0
        %1959 = vdwg.mxu0
        %1960 = vmatprep.subr.bf16.mxu0 %v1420
        %1961 = vmatpush1.bf16.msra.mxu0 %v1419
        %1962 = vmatprep.subr.bf16.mxu0 %v1424
        %1963 = vmatpush1.bf16.msra.mxu0 %v1423
        %1964 = vmatprep.subr.bf16.mxu0 %v1428
        %1965 = vmatpush1.bf16.msra.mxu0 %v1427
        %1966 = vmatprep.subr.bf16.mxu0 %v1432
        %1967 = vmatpush1.bf16.msra.mxu0 %v1431
        %1968 = vmatprep.subr.bf16.mxu0 %v1436
        %1969 = vmatpush1.bf16.msra.mxu0 %v1435
        %1970 = vmatprep.subr.bf16.mxu0 %v1440
        %1971 = vmatpush1.bf16.msra.mxu0 %v1439
        %1972 = vmatprep.subr.bf16.mxu0 %v1444
        %1973 = vmatpush1.bf16.msra.mxu0 %v1443
        %1974 = vmatprep.subr.bf16.mxu0 %v1448
        %1975 = vmatpush1.bf16.msra.mxu0 %v1447
        %1976 = vmatprep.subr.bf16.mxu0 0
        %1977 = vmatpush1.bf16.msra.mxu0 0
        %1978 = vmatprep.subr.bf16.mxu0 0
        %1979 = vmatpush1.bf16.msra.mxu0 0
        %1980 = vmatprep.subr.bf16.mxu0 0
        %1981 = vmatpush1.bf16.msra.mxu0 0
        %1982 = vmatprep.subr.bf16.mxu0 0
        %1983 = vmatpush1.bf16.msra.mxu0 0
        %1984 = vmatprep.subr.bf16.mxu0 0
        %1985 = vmatpush1.bf16.msra.mxu0 0
        %1986 = vmatprep.subr.bf16.mxu0 0
        %1987 = vmatpush1.bf16.msra.mxu0 0
        %1988 = vmatprep.subr.bf16.mxu0 0
        %1989 = vmatpush1.bf16.msra.mxu0 0
        %1990 = vmatprep.subr.bf16.mxu0 0
        %1991 = vmatpush1.bf16.msra.mxu0 0
        %1992 = vmatprep.mubr.bf16.mxu0 0
        %1993 = vmatmul.mubr.bf16.gmra.mrb[0].mxu0 %v545
        %v1994 = vpop.f32.mrb[0].mxu0
        %v1995 = vadd.f32 %v1954, %v1994
        %v1996 = vpop.f32.mrb[0].mxu0
        %v1997 = vadd.f32 %v1956, %v1996
        %v1998 = vpop.f32.mrb[0].mxu0
        %v1999 = vpop.f32.mrb[0].mxu0
        %2000 = vdwg.mxu0
        %v2001 = vmax.f32 %v1831, 0.0
        %v2002 = vmax.f32 %v1833, 0.0
        %v2003 = vmax.f32 %v1995, 0.0
        %v2004 = vmax.f32 %v1997, 0.0
        %v2005 = vpack.c.bf16 %v2001, %v2001
        %v2006 = vpack.c.bf16 %v2002, %v2002
        %v2007 = vpack.c.bf16 %v2003, %v2003
        %v2008 = vpack.c.bf16 %v2004, %v2004
        %v2009 = vld [vmem:[%s3] sm:$0xff]
        %v2010 = vld [vmem:[%s3 + $0x8] sm:$0xff]
        %v2011 = vld [vmem:[%s3 + $0x10] sm:$0xff]
        %v2012 = vld [vmem:[%s3 + $0x18] sm:$0xff]
        %v2013 = vld [vmem:[%s3 + $0x20] sm:$0xff]
        %v2014 = vld [vmem:[%s3 + $0x28] sm:$0xff]
        %v2015 = vld [vmem:[%s3 + $0x30] sm:$0xff]
        %v2016 = vld [vmem:[%s3 + $0x38] sm:$0xff]
        %v2017 = vld [vmem:[%s3 + $0x40] sm:$0xff]
        %v2018 = vld [vmem:[%s3 + $0x48] sm:$0xff]
        %v2019 = vld [vmem:[%s3 + $0x50] sm:$0xff]
        %v2020 = vld [vmem:[%s3 + $0x58] sm:$0xff]
        %v2021 = vld [vmem:[%s3 + $0x60] sm:$0xff]
        %v2022 = vld [vmem:[%s3 + $0x68] sm:$0xff]
        %v2023 = vld [vmem:[%s3 + $0x70] sm:$0xff]
        %v2024 = vld [vmem:[%s3 + $0x78] sm:$0xff]
        %v2025 = vld [vmem:[%s3 + $0x80] sm:$0xff]
        %v2026 = vld [vmem:[%s3 + $0x88] sm:$0xff]
        %v2027 = vld [vmem:[%s3 + $0x90] sm:$0xff]
        %v2028 = vld [vmem:[%s3 + $0x98] sm:$0xff]
        %v2029 = vld [vmem:[%s3 + $0xa0] sm:$0xff]
        %v2030 = vld [vmem:[%s3 + $0xa8] sm:$0xff]
        %v2031 = vld [vmem:[%s3 + $0xb0] sm:$0xff]
        %v2032 = vld [vmem:[%s3 + $0xb8] sm:$0xff]
        %v2033 = vld [vmem:[%s3 + $0xc0] sm:$0xff]
        %v2034 = vld [vmem:[%s3 + $0xc8] sm:$0xff]
        %v2035 = vld [vmem:[%s3 + $0xd0] sm:$0xff]
        %v2036 = vld [vmem:[%s3 + $0xd8] sm:$0xff]
        %v2037 = vld [vmem:[%s3 + $0xe0] sm:$0xff]
        %v2038 = vld [vmem:[%s3 + $0xe8] sm:$0xff]
        %v2039 = vld [vmem:[%s3 + $0xf0] sm:$0xff]
        %v2040 = vld [vmem:[%s3 + $0xf8] sm:$0xff]
        %v2041 = vld [vmem:[%s3 + $0x100] sm:$0xff]
        %v2042 = vld [vmem:[%s3 + $0x108] sm:$0xff]
        %v2043 = vld [vmem:[%s3 + $0x110] sm:$0xff]
        %v2044 = vld [vmem:[%s3 + $0x118] sm:$0xff]
        %v2045 = vld [vmem:[%s3 + $0x120] sm:$0xff]
        %v2046 = vld [vmem:[%s3 + $0x128] sm:$0xff]
        %v2047 = vld [vmem:[%s3 + $0x130] sm:$0xff]
        %v2048 = vld [vmem:[%s3 + $0x138] sm:$0xff]
        %v2049 = vld [vmem:[%s3 + $0x140] sm:$0xff]
        %v2050 = vld [vmem:[%s3 + $0x148] sm:$0xff]
        %v2051 = vld [vmem:[%s3 + $0x150] sm:$0xff]
        %v2052 = vld [vmem:[%s3 + $0x158] sm:$0xff]
        %v2053 = vld [vmem:[%s3 + $0x160] sm:$0xff]
        %v2054 = vld [vmem:[%s3 + $0x168] sm:$0xff]
        %v2055 = vld [vmem:[%s3 + $0x170] sm:$0xff]
        %v2056 = vld [vmem:[%s3 + $0x178] sm:$0xff]
        %v2057 = vld [vmem:[%s3 + $0x180] sm:$0xff]
        %v2058 = vld [vmem:[%s3 + $0x188] sm:$0xff]
        %v2059 = vld [vmem:[%s3 + $0x190] sm:$0xff]
        %v2060 = vld [vmem:[%s3 + $0x198] sm:$0xff]
        %v2061 = vld [vmem:[%s3 + $0x1a0] sm:$0xff]
        %v2062 = vld [vmem:[%s3 + $0x1a8] sm:$0xff]
        %v2063 = vld [vmem:[%s3 + $0x1b0] sm:$0xff]
        %v2064 = vld [vmem:[%s3 + $0x1b8] sm:$0xff]
        %v2065 = vld [vmem:[%s3 + $0x1c0] sm:$0xff]
        %v2066 = vld [vmem:[%s3 + $0x1c8] sm:$0xff]
        %v2067 = vld [vmem:[%s3 + $0x1d0] sm:$0xff]
        %v2068 = vld [vmem:[%s3 + $0x1d8] sm:$0xff]
        %v2069 = vld [vmem:[%s3 + $0x1e0] sm:$0xff]
        %v2070 = vld [vmem:[%s3 + $0x1e8] sm:$0xff]
        %v2071 = vld [vmem:[%s3 + $0x1f0] sm:$0xff]
        %v2072 = vld [vmem:[%s3 + $0x1f8] sm:$0xff]
        %v2073 = vld [vmem:[%s3 + $0x200] sm:$0xff]
        %v2074 = vld [vmem:[%s3 + $0x208] sm:$0xff]
        %v2075 = vld [vmem:[%s3 + $0x210] sm:$0xff]
        %v2076 = vld [vmem:[%s3 + $0x218] sm:$0xff]
        %v2077 = vld [vmem:[%s3 + $0x220] sm:$0xff]
        %v2078 = vld [vmem:[%s3 + $0x228] sm:$0xff]
        %v2079 = vld [vmem:[%s3 + $0x230] sm:$0xff]
        %v2080 = vld [vmem:[%s3 + $0x238] sm:$0xff]
        %v2081 = vld [vmem:[%s3 + $0x240] sm:$0xff]
        %v2082 = vld [vmem:[%s3 + $0x248] sm:$0xff]
        %v2083 = vld [vmem:[%s3 + $0x250] sm:$0xff]
        %v2084 = vld [vmem:[%s3 + $0x258] sm:$0xff]
        %v2085 = vld [vmem:[%s3 + $0x260] sm:$0xff]
        %v2086 = vld [vmem:[%s3 + $0x268] sm:$0xff]
        %v2087 = vld [vmem:[%s3 + $0x270] sm:$0xff]
        %v2088 = vld [vmem:[%s3 + $0x278] sm:$0xff]
        %v2089 = vld [vmem:[%s3 + $0x280] sm:$0xff]
        %v2090 = vld [vmem:[%s3 + $0x288] sm:$0xff]
        %v2091 = vld [vmem:[%s3 + $0x290] sm:$0xff]
        %v2092 = vld [vmem:[%s3 + $0x298] sm:$0xff]
        %v2093 = vld [vmem:[%s3 + $0x2a0] sm:$0xff]
        %v2094 = vld [vmem:[%s3 + $0x2a8] sm:$0xff]
        %v2095 = vld [vmem:[%s3 + $0x2b0] sm:$0xff]
        %v2096 = vld [vmem:[%s3 + $0x2b8] sm:$0xff]
        %v2097 = vld [vmem:[%s3 + $0x2c0] sm:$0xff]
        %v2098 = vld [vmem:[%s3 + $0x2c8] sm:$0xff]
        %v2099 = vld [vmem:[%s3 + $0x2d0] sm:$0xff]
        %v2100 = vld [vmem:[%s3 + $0x2d8] sm:$0xff]
        %v2101 = vld [vmem:[%s3 + $0x2e0] sm:$0xff]
        %v2102 = vld [vmem:[%s3 + $0x2e8] sm:$0xff]
        %v2103 = vld [vmem:[%s3 + $0x2f0] sm:$0xff]
        %v2104 = vld [vmem:[%s3 + $0x2f8] sm:$0xff]
        %v2105 = vld [vmem:[%s3 + $0x300] sm:$0xff]
        %v2106 = vld [vmem:[%s3 + $0x308] sm:$0xff]
        %v2107 = vld [vmem:[%s3 + $0x310] sm:$0xff]
        %v2108 = vld [vmem:[%s3 + $0x318] sm:$0xff]
        %v2109 = vld [vmem:[%s3 + $0x320] sm:$0xff]
        %v2110 = vld [vmem:[%s3 + $0x328] sm:$0xff]
        %v2111 = vld [vmem:[%s3 + $0x330] sm:$0xff]
        %v2112 = vld [vmem:[%s3 + $0x338] sm:$0xff]
        %v2113 = vld [vmem:[%s3 + $0x340] sm:$0xff]
        %v2114 = vld [vmem:[%s3 + $0x348] sm:$0xff]
        %v2115 = vld [vmem:[%s3 + $0x350] sm:$0xff]
        %v2116 = vld [vmem:[%s3 + $0x358] sm:$0xff]
        %v2117 = vld [vmem:[%s3 + $0x360] sm:$0xff]
        %v2118 = vld [vmem:[%s3 + $0x368] sm:$0xff]
        %v2119 = vld [vmem:[%s3 + $0x370] sm:$0xff]
        %v2120 = vld [vmem:[%s3 + $0x378] sm:$0xff]
        %v2121 = vld [vmem:[%s3 + $0x380] sm:$0xff]
        %v2122 = vld [vmem:[%s3 + $0x388] sm:$0xff]
        %v2123 = vld [vmem:[%s3 + $0x390] sm:$0xff]
        %v2124 = vld [vmem:[%s3 + $0x398] sm:$0xff]
        %v2125 = vld [vmem:[%s3 + $0x3a0] sm:$0xff]
        %v2126 = vld [vmem:[%s3 + $0x3a8] sm:$0xff]
        %v2127 = vld [vmem:[%s3 + $0x3b0] sm:$0xff]
        %v2128 = vld [vmem:[%s3 + $0x3b8] sm:$0xff]
        %v2129 = vld [vmem:[%s3 + $0x3c0] sm:$0xff]
        %v2130 = vld [vmem:[%s3 + $0x3c8] sm:$0xff]
        %v2131 = vld [vmem:[%s3 + $0x3d0] sm:$0xff]
        %v2132 = vld [vmem:[%s3 + $0x3d8] sm:$0xff]
        %v2133 = vld [vmem:[%s3 + $0x3e0] sm:$0xff]
        %v2134 = vld [vmem:[%s3 + $0x3e8] sm:$0xff]
        %v2135 = vld [vmem:[%s3 + $0x3f0] sm:$0xff]
        %v2136 = vld [vmem:[%s3 + $0x3f8] sm:$0xff]
        %v2137 = vld [vmem:[%s4] sm:$0xf]
        %v2139 = vlaneseq
        %v2140 = vshrl.u32 %v2139, 7
        %v2141 = vsub.s32 0, %v2140
        %v2142 = vrot.slane %v2137, %v2141
        %v2143 = vlaneseq
        %v2144 = vshrl.u32 %v2143, 7
        %v2145 = vsub.s32 1, %v2144
        %v2146 = vrot.slane %v2137, %v2145
        %v2147 = vlaneseq
        %v2148 = vshrl.u32 %v2147, 7
        %v2149 = vsub.s32 2, %v2148
        %v2150 = vrot.slane %v2137, %v2149
        %v2151 = vlaneseq
        %v2152 = vshrl.u32 %v2151, 7
        %v2153 = vsub.s32 3, %v2152
        %v2154 = vrot.slane %v2137, %v2153
        %v2287 = vunpack.c.l.b16 %v2009
        %v2288 = vunpack.c.h.b16 %v2009
        %v2289 = vunpack.c.l.b16 %v2010
        %v2290 = vunpack.c.h.b16 %v2010
        %v2291 = vunpack.c.l.b16 %v2011
        %v2292 = vunpack.c.h.b16 %v2011
        %v2293 = vunpack.c.l.b16 %v2012
        %v2294 = vunpack.c.h.b16 %v2012
        %v2295 = vunpack.c.l.b16 %v2013
        %v2296 = vunpack.c.h.b16 %v2013
        %v2297 = vunpack.c.l.b16 %v2014
        %v2298 = vunpack.c.h.b16 %v2014
        %v2299 = vunpack.c.l.b16 %v2015
        %v2300 = vunpack.c.h.b16 %v2015
        %v2301 = vunpack.c.l.b16 %v2016
        %v2302 = vunpack.c.h.b16 %v2016
        %v2303 = vunpack.c.l.b16 %v2017
        %v2304 = vunpack.c.h.b16 %v2017
        %v2305 = vunpack.c.l.b16 %v2018
        %v2306 = vunpack.c.h.b16 %v2018
        %v2307 = vunpack.c.l.b16 %v2019
        %v2308 = vunpack.c.h.b16 %v2019
        %v2309 = vunpack.c.l.b16 %v2020
        %v2310 = vunpack.c.h.b16 %v2020
        %v2311 = vunpack.c.l.b16 %v2021
        %v2312 = vunpack.c.h.b16 %v2021
        %v2313 = vunpack.c.l.b16 %v2022
        %v2314 = vunpack.c.h.b16 %v2022
        %v2315 = vunpack.c.l.b16 %v2023
        %v2316 = vunpack.c.h.b16 %v2023
        %v2317 = vunpack.c.l.b16 %v2024
        %v2318 = vunpack.c.h.b16 %v2024
        %v2319 = vunpack.c.l.b16 %v2025
        %v2320 = vunpack.c.h.b16 %v2025
        %v2321 = vunpack.c.l.b16 %v2026
        %v2322 = vunpack.c.h.b16 %v2026
        %v2323 = vunpack.c.l.b16 %v2027
        %v2324 = vunpack.c.h.b16 %v2027
        %v2325 = vunpack.c.l.b16 %v2028
        %v2326 = vunpack.c.h.b16 %v2028
        %v2327 = vunpack.c.l.b16 %v2029
        %v2328 = vunpack.c.h.b16 %v2029
        %v2329 = vunpack.c.l.b16 %v2030
        %v2330 = vunpack.c.h.b16 %v2030
        %v2331 = vunpack.c.l.b16 %v2031
        %v2332 = vunpack.c.h.b16 %v2031
        %v2333 = vunpack.c.l.b16 %v2032
        %v2334 = vunpack.c.h.b16 %v2032
        %v2335 = vunpack.c.l.b16 %v2033
        %v2336 = vunpack.c.h.b16 %v2033
        %v2337 = vunpack.c.l.b16 %v2034
        %v2338 = vunpack.c.h.b16 %v2034
        %v2339 = vunpack.c.l.b16 %v2035
        %v2340 = vunpack.c.h.b16 %v2035
        %v2341 = vunpack.c.l.b16 %v2036
        %v2342 = vunpack.c.h.b16 %v2036
        %v2343 = vunpack.c.l.b16 %v2037
        %v2344 = vunpack.c.h.b16 %v2037
        %v2345 = vunpack.c.l.b16 %v2038
        %v2346 = vunpack.c.h.b16 %v2038
        %v2347 = vunpack.c.l.b16 %v2039
        %v2348 = vunpack.c.h.b16 %v2039
        %v2349 = vunpack.c.l.b16 %v2040
        %v2350 = vunpack.c.h.b16 %v2040
        %v2351 = vunpack.c.l.b16 %v2041
        %v2352 = vunpack.c.h.b16 %v2041
        %v2353 = vunpack.c.l.b16 %v2042
        %v2354 = vunpack.c.h.b16 %v2042
        %v2355 = vunpack.c.l.b16 %v2043
        %v2356 = vunpack.c.h.b16 %v2043
        %v2357 = vunpack.c.l.b16 %v2044
        %v2358 = vunpack.c.h.b16 %v2044
        %v2359 = vunpack.c.l.b16 %v2045
        %v2360 = vunpack.c.h.b16 %v2045
        %v2361 = vunpack.c.l.b16 %v2046
        %v2362 = vunpack.c.h.b16 %v2046
        %v2363 = vunpack.c.l.b16 %v2047
        %v2364 = vunpack.c.h.b16 %v2047
        %v2365 = vunpack.c.l.b16 %v2048
        %v2366 = vunpack.c.h.b16 %v2048
        %v2367 = vunpack.c.l.b16 %v2049
        %v2368 = vunpack.c.h.b16 %v2049
        %v2369 = vunpack.c.l.b16 %v2050
        %v2370 = vunpack.c.h.b16 %v2050
        %v2371 = vunpack.c.l.b16 %v2051
        %v2372 = vunpack.c.h.b16 %v2051
        %v2373 = vunpack.c.l.b16 %v2052
        %v2374 = vunpack.c.h.b16 %v2052
        %v2375 = vunpack.c.l.b16 %v2053
        %v2376 = vunpack.c.h.b16 %v2053
        %v2377 = vunpack.c.l.b16 %v2054
        %v2378 = vunpack.c.h.b16 %v2054
        %v2379 = vunpack.c.l.b16 %v2055
        %v2380 = vunpack.c.h.b16 %v2055
        %v2381 = vunpack.c.l.b16 %v2056
        %v2382 = vunpack.c.h.b16 %v2056
        %v2383 = vunpack.c.l.b16 %v2057
        %v2384 = vunpack.c.h.b16 %v2057
        %v2385 = vunpack.c.l.b16 %v2058
        %v2386 = vunpack.c.h.b16 %v2058
        %v2387 = vunpack.c.l.b16 %v2059
        %v2388 = vunpack.c.h.b16 %v2059
        %v2389 = vunpack.c.l.b16 %v2060
        %v2390 = vunpack.c.h.b16 %v2060
        %v2391 = vunpack.c.l.b16 %v2061
        %v2392 = vunpack.c.h.b16 %v2061
        %v2393 = vunpack.c.l.b16 %v2062
        %v2394 = vunpack.c.h.b16 %v2062
        %v2395 = vunpack.c.l.b16 %v2063
        %v2396 = vunpack.c.h.b16 %v2063
        %v2397 = vunpack.c.l.b16 %v2064
        %v2398 = vunpack.c.h.b16 %v2064
        %v2399 = vunpack.c.l.b16 %v2065
        %v2400 = vunpack.c.h.b16 %v2065
        %v2401 = vunpack.c.l.b16 %v2066
        %v2402 = vunpack.c.h.b16 %v2066
        %v2403 = vunpack.c.l.b16 %v2067
        %v2404 = vunpack.c.h.b16 %v2067
        %v2405 = vunpack.c.l.b16 %v2068
        %v2406 = vunpack.c.h.b16 %v2068
        %v2407 = vunpack.c.l.b16 %v2069
        %v2408 = vunpack.c.h.b16 %v2069
        %v2409 = vunpack.c.l.b16 %v2070
        %v2410 = vunpack.c.h.b16 %v2070
        %v2411 = vunpack.c.l.b16 %v2071
        %v2412 = vunpack.c.h.b16 %v2071
        %v2413 = vunpack.c.l.b16 %v2072
        %v2414 = vunpack.c.h.b16 %v2072
        %v2415 = vunpack.c.l.b16 %v2073
        %v2416 = vunpack.c.h.b16 %v2073
        %v2417 = vunpack.c.l.b16 %v2074
        %v2418 = vunpack.c.h.b16 %v2074
        %v2419 = vunpack.c.l.b16 %v2075
        %v2420 = vunpack.c.h.b16 %v2075
        %v2421 = vunpack.c.l.b16 %v2076
        %v2422 = vunpack.c.h.b16 %v2076
        %v2423 = vunpack.c.l.b16 %v2077
        %v2424 = vunpack.c.h.b16 %v2077
        %v2425 = vunpack.c.l.b16 %v2078
        %v2426 = vunpack.c.h.b16 %v2078
        %v2427 = vunpack.c.l.b16 %v2079
        %v2428 = vunpack.c.h.b16 %v2079
        %v2429 = vunpack.c.l.b16 %v2080
        %v2430 = vunpack.c.h.b16 %v2080
        %v2431 = vunpack.c.l.b16 %v2081
        %v2432 = vunpack.c.h.b16 %v2081
        %v2433 = vunpack.c.l.b16 %v2082
        %v2434 = vunpack.c.h.b16 %v2082
        %v2435 = vunpack.c.l.b16 %v2083
        %v2436 = vunpack.c.h.b16 %v2083
        %v2437 = vunpack.c.l.b16 %v2084
        %v2438 = vunpack.c.h.b16 %v2084
        %v2439 = vunpack.c.l.b16 %v2085
        %v2440 = vunpack.c.h.b16 %v2085
        %v2441 = vunpack.c.l.b16 %v2086
        %v2442 = vunpack.c.h.b16 %v2086
        %v2443 = vunpack.c.l.b16 %v2087
        %v2444 = vunpack.c.h.b16 %v2087
        %v2445 = vunpack.c.l.b16 %v2088
        %v2446 = vunpack.c.h.b16 %v2088
        %v2447 = vunpack.c.l.b16 %v2089
        %v2448 = vunpack.c.h.b16 %v2089
        %v2449 = vunpack.c.l.b16 %v2090
        %v2450 = vunpack.c.h.b16 %v2090
        %v2451 = vunpack.c.l.b16 %v2091
        %v2452 = vunpack.c.h.b16 %v2091
        %v2453 = vunpack.c.l.b16 %v2092
        %v2454 = vunpack.c.h.b16 %v2092
        %v2455 = vunpack.c.l.b16 %v2093
        %v2456 = vunpack.c.h.b16 %v2093
        %v2457 = vunpack.c.l.b16 %v2094
        %v2458 = vunpack.c.h.b16 %v2094
        %v2459 = vunpack.c.l.b16 %v2095
        %v2460 = vunpack.c.h.b16 %v2095
        %v2461 = vunpack.c.l.b16 %v2096
        %v2462 = vunpack.c.h.b16 %v2096
        %v2463 = vunpack.c.l.b16 %v2097
        %v2464 = vunpack.c.h.b16 %v2097
        %v2465 = vunpack.c.l.b16 %v2098
        %v2466 = vunpack.c.h.b16 %v2098
        %v2467 = vunpack.c.l.b16 %v2099
        %v2468 = vunpack.c.h.b16 %v2099
        %v2469 = vunpack.c.l.b16 %v2100
        %v2470 = vunpack.c.h.b16 %v2100
        %v2471 = vunpack.c.l.b16 %v2101
        %v2472 = vunpack.c.h.b16 %v2101
        %v2473 = vunpack.c.l.b16 %v2102
        %v2474 = vunpack.c.h.b16 %v2102
        %v2475 = vunpack.c.l.b16 %v2103
        %v2476 = vunpack.c.h.b16 %v2103
        %v2477 = vunpack.c.l.b16 %v2104
        %v2478 = vunpack.c.h.b16 %v2104
        %v2479 = vunpack.c.l.b16 %v2105
        %v2480 = vunpack.c.h.b16 %v2105
        %v2481 = vunpack.c.l.b16 %v2106
        %v2482 = vunpack.c.h.b16 %v2106
        %v2483 = vunpack.c.l.b16 %v2107
        %v2484 = vunpack.c.h.b16 %v2107
        %v2485 = vunpack.c.l.b16 %v2108
        %v2486 = vunpack.c.h.b16 %v2108
        %v2487 = vunpack.c.l.b16 %v2109
        %v2488 = vunpack.c.h.b16 %v2109
        %v2489 = vunpack.c.l.b16 %v2110
        %v2490 = vunpack.c.h.b16 %v2110
        %v2491 = vunpack.c.l.b16 %v2111
        %v2492 = vunpack.c.h.b16 %v2111
        %v2493 = vunpack.c.l.b16 %v2112
        %v2494 = vunpack.c.h.b16 %v2112
        %v2495 = vunpack.c.l.b16 %v2113
        %v2496 = vunpack.c.h.b16 %v2113
        %v2497 = vunpack.c.l.b16 %v2114
        %v2498 = vunpack.c.h.b16 %v2114
        %v2499 = vunpack.c.l.b16 %v2115
        %v2500 = vunpack.c.h.b16 %v2115
        %v2501 = vunpack.c.l.b16 %v2116
        %v2502 = vunpack.c.h.b16 %v2116
        %v2503 = vunpack.c.l.b16 %v2117
        %v2504 = vunpack.c.h.b16 %v2117
        %v2505 = vunpack.c.l.b16 %v2118
        %v2506 = vunpack.c.h.b16 %v2118
        %v2507 = vunpack.c.l.b16 %v2119
        %v2508 = vunpack.c.h.b16 %v2119
        %v2509 = vunpack.c.l.b16 %v2120
        %v2510 = vunpack.c.h.b16 %v2120
        %v2511 = vunpack.c.l.b16 %v2121
        %v2512 = vunpack.c.h.b16 %v2121
        %v2513 = vunpack.c.l.b16 %v2122
        %v2514 = vunpack.c.h.b16 %v2122
        %v2515 = vunpack.c.l.b16 %v2123
        %v2516 = vunpack.c.h.b16 %v2123
        %v2517 = vunpack.c.l.b16 %v2124
        %v2518 = vunpack.c.h.b16 %v2124
        %v2519 = vunpack.c.l.b16 %v2125
        %v2520 = vunpack.c.h.b16 %v2125
        %v2521 = vunpack.c.l.b16 %v2126
        %v2522 = vunpack.c.h.b16 %v2126
        %v2523 = vunpack.c.l.b16 %v2127
        %v2524 = vunpack.c.h.b16 %v2127
        %v2525 = vunpack.c.l.b16 %v2128
        %v2526 = vunpack.c.h.b16 %v2128
        %v2527 = vunpack.c.l.b16 %v2129
        %v2528 = vunpack.c.h.b16 %v2129
        %v2529 = vunpack.c.l.b16 %v2130
        %v2530 = vunpack.c.h.b16 %v2130
        %v2531 = vunpack.c.l.b16 %v2131
        %v2532 = vunpack.c.h.b16 %v2131
        %v2533 = vunpack.c.l.b16 %v2132
        %v2534 = vunpack.c.h.b16 %v2132
        %v2535 = vunpack.c.l.b16 %v2133
        %v2536 = vunpack.c.h.b16 %v2133
        %v2537 = vunpack.c.l.b16 %v2134
        %v2538 = vunpack.c.h.b16 %v2134
        %v2539 = vunpack.c.l.b16 %v2135
        %v2540 = vunpack.c.h.b16 %v2135
        %v2541 = vunpack.c.l.b16 %v2136
        %v2542 = vunpack.c.h.b16 %v2136
        %v2543 = vpack.c.b16 %v2291, %v2287
        %v2544 = vpack.c.b16 %v2292, %v2288
        %v2545 = vpack.c.b16 %v2293, %v2289
        %v2546 = vpack.c.b16 %v2294, %v2290
        %v2547 = vpack.c.b16 %v2299, %v2295
        %v2548 = vpack.c.b16 %v2300, %v2296
        %v2549 = vpack.c.b16 %v2301, %v2297
        %v2550 = vpack.c.b16 %v2302, %v2298
        %v2551 = vpack.c.b16 %v2307, %v2303
        %v2552 = vpack.c.b16 %v2308, %v2304
        %v2553 = vpack.c.b16 %v2309, %v2305
        %v2554 = vpack.c.b16 %v2310, %v2306
        %v2555 = vpack.c.b16 %v2315, %v2311
        %v2556 = vpack.c.b16 %v2316, %v2312
        %v2557 = vpack.c.b16 %v2317, %v2313
        %v2558 = vpack.c.b16 %v2318, %v2314
        %v2559 = vpack.c.b16 %v2323, %v2319
        %v2560 = vpack.c.b16 %v2324, %v2320
        %v2561 = vpack.c.b16 %v2325, %v2321
        %v2562 = vpack.c.b16 %v2326, %v2322
        %v2563 = vpack.c.b16 %v2331, %v2327
        %v2564 = vpack.c.b16 %v2332, %v2328
        %v2565 = vpack.c.b16 %v2333, %v2329
        %v2566 = vpack.c.b16 %v2334, %v2330
        %v2567 = vpack.c.b16 %v2339, %v2335
        %v2568 = vpack.c.b16 %v2340, %v2336
        %v2569 = vpack.c.b16 %v2341, %v2337
        %v2570 = vpack.c.b16 %v2342, %v2338
        %v2571 = vpack.c.b16 %v2347, %v2343
        %v2572 = vpack.c.b16 %v2348, %v2344
        %v2573 = vpack.c.b16 %v2349, %v2345
        %v2574 = vpack.c.b16 %v2350, %v2346
        %v2575 = vpack.c.b16 %v2355, %v2351
        %v2576 = vpack.c.b16 %v2356, %v2352
        %v2577 = vpack.c.b16 %v2357, %v2353
        %v2578 = vpack.c.b16 %v2358, %v2354
        %v2579 = vpack.c.b16 %v2363, %v2359
        %v2580 = vpack.c.b16 %v2364, %v2360
        %v2581 = vpack.c.b16 %v2365, %v2361
        %v2582 = vpack.c.b16 %v2366, %v2362
        %v2583 = vpack.c.b16 %v2371, %v2367
        %v2584 = vpack.c.b16 %v2372, %v2368
        %v2585 = vpack.c.b16 %v2373, %v2369
        %v2586 = vpack.c.b16 %v2374, %v2370
        %v2587 = vpack.c.b16 %v2379, %v2375
        %v2588 = vpack.c.b16 %v2380, %v2376
        %v2589 = vpack.c.b16 %v2381, %v2377
        %v2590 = vpack.c.b16 %v2382, %v2378
        %v2591 = vpack.c.b16 %v2387, %v2383
        %v2592 = vpack.c.b16 %v2388, %v2384
        %v2593 = vpack.c.b16 %v2389, %v2385
        %v2594 = vpack.c.b16 %v2390, %v2386
        %v2595 = vpack.c.b16 %v2395, %v2391
        %v2596 = vpack.c.b16 %v2396, %v2392
        %v2597 = vpack.c.b16 %v2397, %v2393
        %v2598 = vpack.c.b16 %v2398, %v2394
        %v2599 = vpack.c.b16 %v2403, %v2399
        %v2600 = vpack.c.b16 %v2404, %v2400
        %v2601 = vpack.c.b16 %v2405, %v2401
        %v2602 = vpack.c.b16 %v2406, %v2402
        %v2603 = vpack.c.b16 %v2411, %v2407
        %v2604 = vpack.c.b16 %v2412, %v2408
        %v2605 = vpack.c.b16 %v2413, %v2409
        %v2606 = vpack.c.b16 %v2414, %v2410
        %v2607 = vpack.c.b16 %v2419, %v2415
        %v2608 = vpack.c.b16 %v2420, %v2416
        %v2609 = vpack.c.b16 %v2421, %v2417
        %v2610 = vpack.c.b16 %v2422, %v2418
        %v2611 = vpack.c.b16 %v2427, %v2423
        %v2612 = vpack.c.b16 %v2428, %v2424
        %v2613 = vpack.c.b16 %v2429, %v2425
        %v2614 = vpack.c.b16 %v2430, %v2426
        %v2615 = vpack.c.b16 %v2435, %v2431
        %v2616 = vpack.c.b16 %v2436, %v2432
        %v2617 = vpack.c.b16 %v2437, %v2433
        %v2618 = vpack.c.b16 %v2438, %v2434
        %v2619 = vpack.c.b16 %v2443, %v2439
        %v2620 = vpack.c.b16 %v2444, %v2440
        %v2621 = vpack.c.b16 %v2445, %v2441
        %v2622 = vpack.c.b16 %v2446, %v2442
        %v2623 = vpack.c.b16 %v2451, %v2447
        %v2624 = vpack.c.b16 %v2452, %v2448
        %v2625 = vpack.c.b16 %v2453, %v2449
        %v2626 = vpack.c.b16 %v2454, %v2450
        %v2627 = vpack.c.b16 %v2459, %v2455
        %v2628 = vpack.c.b16 %v2460, %v2456
        %v2629 = vpack.c.b16 %v2461, %v2457
        %v2630 = vpack.c.b16 %v2462, %v2458
        %v2631 = vpack.c.b16 %v2467, %v2463
        %v2632 = vpack.c.b16 %v2468, %v2464
        %v2633 = vpack.c.b16 %v2469, %v2465
        %v2634 = vpack.c.b16 %v2470, %v2466
        %v2635 = vpack.c.b16 %v2475, %v2471
        %v2636 = vpack.c.b16 %v2476, %v2472
        %v2637 = vpack.c.b16 %v2477, %v2473
        %v2638 = vpack.c.b16 %v2478, %v2474
        %v2639 = vpack.c.b16 %v2483, %v2479
        %v2640 = vpack.c.b16 %v2484, %v2480
        %v2641 = vpack.c.b16 %v2485, %v2481
        %v2642 = vpack.c.b16 %v2486, %v2482
        %v2643 = vpack.c.b16 %v2491, %v2487
        %v2644 = vpack.c.b16 %v2492, %v2488
        %v2645 = vpack.c.b16 %v2493, %v2489
        %v2646 = vpack.c.b16 %v2494, %v2490
        %v2647 = vpack.c.b16 %v2499, %v2495
        %v2648 = vpack.c.b16 %v2500, %v2496
        %v2649 = vpack.c.b16 %v2501, %v2497
        %v2650 = vpack.c.b16 %v2502, %v2498
        %v2651 = vpack.c.b16 %v2507, %v2503
        %v2652 = vpack.c.b16 %v2508, %v2504
        %v2653 = vpack.c.b16 %v2509, %v2505
        %v2654 = vpack.c.b16 %v2510, %v2506
        %v2655 = vpack.c.b16 %v2515, %v2511
        %v2656 = vpack.c.b16 %v2516, %v2512
        %v2657 = vpack.c.b16 %v2517, %v2513
        %v2658 = vpack.c.b16 %v2518, %v2514
        %v2659 = vpack.c.b16 %v2523, %v2519
        %v2660 = vpack.c.b16 %v2524, %v2520
        %v2661 = vpack.c.b16 %v2525, %v2521
        %v2662 = vpack.c.b16 %v2526, %v2522
        %v2663 = vpack.c.b16 %v2531, %v2527
        %v2664 = vpack.c.b16 %v2532, %v2528
        %v2665 = vpack.c.b16 %v2533, %v2529
        %v2666 = vpack.c.b16 %v2534, %v2530
        %v2667 = vpack.c.b16 %v2539, %v2535
        %v2668 = vpack.c.b16 %v2540, %v2536
        %v2669 = vpack.c.b16 %v2541, %v2537
        %v2670 = vpack.c.b16 %v2542, %v2538
        %2799 = vmatprep.subr.bf16.mxu0 %v2544
        %2800 = vmatpush1.bf16.msra.mxu0 %v2543
        %2801 = vmatprep.subr.bf16.mxu0 %v2548
        %2802 = vmatpush1.bf16.msra.mxu0 %v2547
        %2803 = vmatprep.subr.bf16.mxu0 %v2552
        %2804 = vmatpush1.bf16.msra.mxu0 %v2551
        %2805 = vmatprep.subr.bf16.mxu0 %v2556
        %2806 = vmatpush1.bf16.msra.mxu0 %v2555
        %2807 = vmatprep.subr.bf16.mxu0 %v2560
        %2808 = vmatpush1.bf16.msra.mxu0 %v2559
        %2809 = vmatprep.subr.bf16.mxu0 %v2564
        %2810 = vmatpush1.bf16.msra.mxu0 %v2563
        %2811 = vmatprep.subr.bf16.mxu0 %v2568
        %2812 = vmatpush1.bf16.msra.mxu0 %v2567
        %2813 = vmatprep.subr.bf16.mxu0 %v2572
        %2814 = vmatpush1.bf16.msra.mxu0 %v2571
        %2815 = vmatprep.subr.bf16.mxu0 %v2576
        %2816 = vmatpush1.bf16.msra.mxu0 %v2575
        %2817 = vmatprep.subr.bf16.mxu0 %v2580
        %2818 = vmatpush1.bf16.msra.mxu0 %v2579
        %2819 = vmatprep.subr.bf16.mxu0 %v2584
        %2820 = vmatpush1.bf16.msra.mxu0 %v2583
        %2821 = vmatprep.subr.bf16.mxu0 %v2588
        %2822 = vmatpush1.bf16.msra.mxu0 %v2587
        %2823 = vmatprep.subr.bf16.mxu0 %v2592
        %2824 = vmatpush1.bf16.msra.mxu0 %v2591
        %2825 = vmatprep.subr.bf16.mxu0 %v2596
        %2826 = vmatpush1.bf16.msra.mxu0 %v2595
        %2827 = vmatprep.subr.bf16.mxu0 %v2600
        %2828 = vmatpush1.bf16.msra.mxu0 %v2599
        %2829 = vmatprep.subr.bf16.mxu0 %v2604
        %2830 = vmatpush1.bf16.msra.mxu0 %v2603
        %2831 = vmatprep.mubr.bf16.mxu0 %v2006
        %2832 = vmatmul.mubr.bf16.gmra.mrb[0].mxu0 %v2005
        %v2833 = vpop.f32.mrb[0].mxu0
        %v2834 = vadd.f32 %v2142, %v2833
        %v2835 = vpop.f32.mrb[0].mxu0
        %v2836 = vadd.f32 %v2146, %v2835
        %v2837 = vpop.f32.mrb[0].mxu0
        %v2838 = vpop.f32.mrb[0].mxu0
        %2839 = vdwg.mxu0
        %2840 = vmatprep.subr.bf16.mxu0 %v2608
        %2841 = vmatpush1.bf16.msra.mxu0 %v2607
        %2842 = vmatprep.subr.bf16.mxu0 %v2612
        %2843 = vmatpush1.bf16.msra.mxu0 %v2611
        %2844 = vmatprep.subr.bf16.mxu0 %v2616
        %2845 = vmatpush1.bf16.msra.mxu0 %v2615
        %2846 = vmatprep.subr.bf16.mxu0 %v2620
        %2847 = vmatpush1.bf16.msra.mxu0 %v2619
        %2848 = vmatprep.subr.bf16.mxu0 %v2624
        %2849 = vmatpush1.bf16.msra.mxu0 %v2623
        %2850 = vmatprep.subr.bf16.mxu0 %v2628
        %2851 = vmatpush1.bf16.msra.mxu0 %v2627
        %2852 = vmatprep.subr.bf16.mxu0 %v2632
        %2853 = vmatpush1.bf16.msra.mxu0 %v2631
        %2854 = vmatprep.subr.bf16.mxu0 %v2636
        %2855 = vmatpush1.bf16.msra.mxu0 %v2635
        %2856 = vmatprep.subr.bf16.mxu0 %v2640
        %2857 = vmatpush1.bf16.msra.mxu0 %v2639
        %2858 = vmatprep.subr.bf16.mxu0 %v2644
        %2859 = vmatpush1.bf16.msra.mxu0 %v2643
        %2860 = vmatprep.subr.bf16.mxu0 %v2648
        %2861 = vmatpush1.bf16.msra.mxu0 %v2647
        %2862 = vmatprep.subr.bf16.mxu0 %v2652
        %2863 = vmatpush1.bf16.msra.mxu0 %v2651
        %2864 = vmatprep.subr.bf16.mxu0 %v2656
        %2865 = vmatpush1.bf16.msra.mxu0 %v2655
        %2866 = vmatprep.subr.bf16.mxu0 %v2660
        %2867 = vmatpush1.bf16.msra.mxu0 %v2659
        %2868 = vmatprep.subr.bf16.mxu0 %v2664
        %2869 = vmatpush1.bf16.msra.mxu0 %v2663
        %2870 = vmatprep.subr.bf16.mxu0 %v2668
        %2871 = vmatpush1.bf16.msra.mxu0 %v2667
        %2872 = vmatprep.mubr.bf16.mxu0 %v2008
        %2873 = vmatmul.mubr.bf16.gmra.mrb[0].mxu0 %v2007
        %v2874 = vpop.f32.mrb[0].mxu0
        %v2875 = vadd.f32 %v2834, %v2874
        %v2876 = vpop.f32.mrb[0].mxu0
        %v2877 = vadd.f32 %v2836, %v2876
        %v2878 = vpop.f32.mrb[0].mxu0
        %v2879 = vpop.f32.mrb[0].mxu0
        %2880 = vdwg.mxu0
        %2881 = vmatprep.subr.bf16.mxu0 %v2546
        %2882 = vmatpush1.bf16.msra.mxu0 %v2545
        %2883 = vmatprep.subr.bf16.mxu0 %v2550
        %2884 = vmatpush1.bf16.msra.mxu0 %v2549
        %2885 = vmatprep.subr.bf16.mxu0 %v2554
        %2886 = vmatpush1.bf16.msra.mxu0 %v2553
        %2887 = vmatprep.subr.bf16.mxu0 %v2558
        %2888 = vmatpush1.bf16.msra.mxu0 %v2557
        %2889 = vmatprep.subr.bf16.mxu0 %v2562
        %2890 = vmatpush1.bf16.msra.mxu0 %v2561
        %2891 = vmatprep.subr.bf16.mxu0 %v2566
        %2892 = vmatpush1.bf16.msra.mxu0 %v2565
        %2893 = vmatprep.subr.bf16.mxu0 %v2570
        %2894 = vmatpush1.bf16.msra.mxu0 %v2569
        %2895 = vmatprep.subr.bf16.mxu0 %v2574
        %2896 = vmatpush1.bf16.msra.mxu0 %v2573
        %2897 = vmatprep.subr.bf16.mxu0 %v2578
        %2898 = vmatpush1.bf16.msra.mxu0 %v2577
        %2899 = vmatprep.subr.bf16.mxu0 %v2582
        %2900 = vmatpush1.bf16.msra.mxu0 %v2581
        %2901 = vmatprep.subr.bf16.mxu0 %v2586
        %2902 = vmatpush1.bf16.msra.mxu0 %v2585
        %2903 = vmatprep.subr.bf16.mxu0 %v2590
        %2904 = vmatpush1.bf16.msra.mxu0 %v2589
        %2905 = vmatprep.subr.bf16.mxu0 %v2594
        %2906 = vmatpush1.bf16.msra.mxu0 %v2593
        %2907 = vmatprep.subr.bf16.mxu0 %v2598
        %2908 = vmatpush1.bf16.msra.mxu0 %v2597
        %2909 = vmatprep.subr.bf16.mxu0 %v2602
        %2910 = vmatpush1.bf16.msra.mxu0 %v2601
        %2911 = vmatprep.subr.bf16.mxu0 %v2606
        %2912 = vmatpush1.bf16.msra.mxu0 %v2605
        %2913 = vmatprep.mubr.bf16.mxu0 %v2006
        %2914 = vmatmul.mubr.bf16.gmra.mrb[0].mxu0 %v2005
        %v2915 = vpop.f32.mrb[0].mxu0
        %v2916 = vadd.f32 %v2150, %v2915
        %v2917 = vpop.f32.mrb[0].mxu0
        %v2918 = vadd.f32 %v2154, %v2917
        %v2919 = vpop.f32.mrb[0].mxu0
        %v2920 = vpop.f32.mrb[0].mxu0
        %2921 = vdwg.mxu0
        %2922 = vmatprep.subr.bf16.mxu0 %v2610
        %2923 = vmatpush1.bf16.msra.mxu0 %v2609
        %2924 = vmatprep.subr.bf16.mxu0 %v2614
        %2925 = vmatpush1.bf16.msra.mxu0 %v2613
        %2926 = vmatprep.subr.bf16.mxu0 %v2618
        %2927 = vmatpush1.bf16.msra.mxu0 %v2617
        %2928 = vmatprep.subr.bf16.mxu0 %v2622
        %2929 = vmatpush1.bf16.msra.mxu0 %v2621
        %2930 = vmatprep.subr.bf16.mxu0 %v2626
        %2931 = vmatpush1.bf16.msra.mxu0 %v2625
        %2932 = vmatprep.subr.bf16.mxu0 %v2630
        %2933 = vmatpush1.bf16.msra.mxu0 %v2629
        %2934 = vmatprep.subr.bf16.mxu0 %v2634
        %2935 = vmatpush1.bf16.msra.mxu0 %v2633
        %2936 = vmatprep.subr.bf16.mxu0 %v2638
        %2937 = vmatpush1.bf16.msra.mxu0 %v2637
        %2938 = vmatprep.subr.bf16.mxu0 %v2642
        %2939 = vmatpush1.bf16.msra.mxu0 %v2641
        %2940 = vmatprep.subr.bf16.mxu0 %v2646
        %2941 = vmatpush1.bf16.msra.mxu0 %v2645
        %2942 = vmatprep.subr.bf16.mxu0 %v2650
        %2943 = vmatpush1.bf16.msra.mxu0 %v2649
        %2944 = vmatprep.subr.bf16.mxu0 %v2654
        %2945 = vmatpush1.bf16.msra.mxu0 %v2653
        %2946 = vmatprep.subr.bf16.mxu0 %v2658
        %2947 = vmatpush1.bf16.msra.mxu0 %v2657
        %2948 = vmatprep.subr.bf16.mxu0 %v2662
        %2949 = vmatpush1.bf16.msra.mxu0 %v2661
        %2950 = vmatprep.subr.bf16.mxu0 %v2666
        %2951 = vmatpush1.bf16.msra.mxu0 %v2665
        %2952 = vmatprep.subr.bf16.mxu0 %v2670
        %2953 = vmatpush1.bf16.msra.mxu0 %v2669
        %2954 = vmatprep.mubr.bf16.mxu0 %v2008
        %2955 = vmatmul.mubr.bf16.gmra.mrb[0].mxu0 %v2007
        %v2956 = vpop.f32.mrb[0].mxu0
        %v2957 = vadd.f32 %v2916, %v2956
        %v2958 = vpop.f32.mrb[0].mxu0
        %v2959 = vadd.f32 %v2918, %v2958
        %v2960 = vpop.f32.mrb[0].mxu0
        %v2961 = vpop.f32.mrb[0].mxu0
        %2962 = vdwg.mxu0
        %v2963 = vmax.f32 %v2875, 0.0
        %v2964 = vmax.f32 %v2877, 0.0
        %v2965 = vmax.f32 %v2957, 0.0
        %v2966 = vmax.f32 %v2959, 0.0
        %v2967 = vpack.c.bf16 %v2963, %v2963
        %v2968 = vpack.c.bf16 %v2964, %v2964
        %v2969 = vpack.c.bf16 %v2965, %v2965
        %v2970 = vpack.c.bf16 %v2966, %v2966
        %v2971 = vld [vmem:[%s5] sm:$0xf]
        %v2972 = vld [vmem:[%s5 + $0x4] sm:$0xf]
        %v2973 = vld [vmem:[%s5 + $0x8] sm:$0xf]
        %v2974 = vld [vmem:[%s5 + $0xc] sm:$0xf]
        %v2975 = vld [vmem:[%s5 + $0x10] sm:$0xf]
        %v2976 = vld [vmem:[%s5 + $0x14] sm:$0xf]
        %v2977 = vld [vmem:[%s5 + $0x18] sm:$0xf]
        %v2978 = vld [vmem:[%s5 + $0x1c] sm:$0xf]
        %v2979 = vld [vmem:[%s5 + $0x20] sm:$0xf]
        %v2980 = vld [vmem:[%s5 + $0x24] sm:$0xf]
        %v2981 = vld [vmem:[%s5 + $0x28] sm:$0xf]
        %v2982 = vld [vmem:[%s5 + $0x2c] sm:$0xf]
        %v2983 = vld [vmem:[%s5 + $0x30] sm:$0xf]
        %v2984 = vld [vmem:[%s5 + $0x34] sm:$0xf]
        %v2985 = vld [vmem:[%s5 + $0x38] sm:$0xf]
        %v2986 = vld [vmem:[%s5 + $0x3c] sm:$0xf]
        %v2987 = vld [vmem:[%s5 + $0x40] sm:$0xf]
        %v2988 = vld [vmem:[%s5 + $0x44] sm:$0xf]
        %v2989 = vld [vmem:[%s5 + $0x48] sm:$0xf]
        %v2990 = vld [vmem:[%s5 + $0x4c] sm:$0xf]
        %v2991 = vld [vmem:[%s5 + $0x50] sm:$0xf]
        %v2992 = vld [vmem:[%s5 + $0x54] sm:$0xf]
        %v2993 = vld [vmem:[%s5 + $0x58] sm:$0xf]
        %v2994 = vld [vmem:[%s5 + $0x5c] sm:$0xf]
        %v2995 = vld [vmem:[%s5 + $0x60] sm:$0xf]
        %v2996 = vld [vmem:[%s5 + $0x64] sm:$0xf]
        %v2997 = vld [vmem:[%s5 + $0x68] sm:$0xf]
        %v2998 = vld [vmem:[%s5 + $0x6c] sm:$0xf]
        %v2999 = vld [vmem:[%s5 + $0x70] sm:$0xf]
        %v3000 = vld [vmem:[%s5 + $0x74] sm:$0xf]
        %v3001 = vld [vmem:[%s5 + $0x78] sm:$0xf]
        %v3002 = vld [vmem:[%s5 + $0x7c] sm:$0xf]
        %v3003 = vld [vmem:[%s5 + $0x80] sm:$0xf]
        %v3004 = vld [vmem:[%s5 + $0x84] sm:$0xf]
        %v3005 = vld [vmem:[%s5 + $0x88] sm:$0xf]
        %v3006 = vld [vmem:[%s5 + $0x8c] sm:$0xf]
        %v3007 = vld [vmem:[%s5 + $0x90] sm:$0xf]
        %v3008 = vld [vmem:[%s5 + $0x94] sm:$0xf]
        %v3009 = vld [vmem:[%s5 + $0x98] sm:$0xf]
        %v3010 = vld [vmem:[%s5 + $0x9c] sm:$0xf]
        %v3011 = vld [vmem:[%s5 + $0xa0] sm:$0xf]
        %v3012 = vld [vmem:[%s5 + $0xa4] sm:$0xf]
        %v3013 = vld [vmem:[%s5 + $0xa8] sm:$0xf]
        %v3014 = vld [vmem:[%s5 + $0xac] sm:$0xf]
        %v3015 = vld [vmem:[%s5 + $0xb0] sm:$0xf]
        %v3016 = vld [vmem:[%s5 + $0xb4] sm:$0xf]
        %v3017 = vld [vmem:[%s5 + $0xb8] sm:$0xf]
        %v3018 = vld [vmem:[%s5 + $0xbc] sm:$0xf]
        %v3019 = vld [vmem:[%s5 + $0xc0] sm:$0xf]
        %v3020 = vld [vmem:[%s5 + $0xc4] sm:$0xf]
        %v3021 = vld [vmem:[%s5 + $0xc8] sm:$0xf]
        %v3022 = vld [vmem:[%s5 + $0xcc] sm:$0xf]
        %v3023 = vld [vmem:[%s5 + $0xd0] sm:$0xf]
        %v3024 = vld [vmem:[%s5 + $0xd4] sm:$0xf]
        %v3025 = vld [vmem:[%s5 + $0xd8] sm:$0xf]
        %v3026 = vld [vmem:[%s5 + $0xdc] sm:$0xf]
        %v3027 = vld [vmem:[%s5 + $0xe0] sm:$0xf]
        %v3028 = vld [vmem:[%s5 + $0xe4] sm:$0xf]
        %v3029 = vld [vmem:[%s5 + $0xe8] sm:$0xf]
        %v3030 = vld [vmem:[%s5 + $0xec] sm:$0xf]
        %v3031 = vld [vmem:[%s5 + $0xf0] sm:$0xf]
        %v3032 = vld [vmem:[%s5 + $0xf4] sm:$0xf]
        %v3033 = vld [vmem:[%s5 + $0xf8] sm:$0xf]
        %v3034 = vld [vmem:[%s5 + $0xfc] sm:$0xf]
        %v3035 = vld [vmem:[%s6] sm:$0x1]
        %v3037 = vlaneseq
        %v3038 = vshrl.u32 %v3037, 7
        %v3039 = vsub.s32 0, %v3038
        %v3040 = vrot.slane %v3035, %v3039
        %v3106 = vunpack.c.l.b16 %v2971
        %v3107 = vunpack.c.l.b16 %v2972
        %v3108 = vunpack.c.l.b16 %v2973
        %v3109 = vunpack.c.l.b16 %v2974
        %v3110 = vunpack.c.l.b16 %v2975
        %v3111 = vunpack.c.l.b16 %v2976
        %v3112 = vunpack.c.l.b16 %v2977
        %v3113 = vunpack.c.l.b16 %v2978
        %v3114 = vunpack.c.l.b16 %v2979
        %v3115 = vunpack.c.l.b16 %v2980
        %v3116 = vunpack.c.l.b16 %v2981
        %v3117 = vunpack.c.l.b16 %v2982
        %v3118 = vunpack.c.l.b16 %v2983
        %v3119 = vunpack.c.l.b16 %v2984
        %v3120 = vunpack.c.l.b16 %v2985
        %v3121 = vunpack.c.l.b16 %v2986
        %v3122 = vunpack.c.l.b16 %v2987
        %v3123 = vunpack.c.l.b16 %v2988
        %v3124 = vunpack.c.l.b16 %v2989
        %v3125 = vunpack.c.l.b16 %v2990
        %v3126 = vunpack.c.l.b16 %v2991
        %v3127 = vunpack.c.l.b16 %v2992
        %v3128 = vunpack.c.l.b16 %v2993
        %v3129 = vunpack.c.l.b16 %v2994
        %v3130 = vunpack.c.l.b16 %v2995
        %v3131 = vunpack.c.l.b16 %v2996
        %v3132 = vunpack.c.l.b16 %v2997
        %v3133 = vunpack.c.l.b16 %v2998
        %v3134 = vunpack.c.l.b16 %v2999
        %v3135 = vunpack.c.l.b16 %v3000
        %v3136 = vunpack.c.l.b16 %v3001
        %v3137 = vunpack.c.l.b16 %v3002
        %v3138 = vunpack.c.l.b16 %v3003
        %v3139 = vunpack.c.l.b16 %v3004
        %v3140 = vunpack.c.l.b16 %v3005
        %v3141 = vunpack.c.l.b16 %v3006
        %v3142 = vunpack.c.l.b16 %v3007
        %v3143 = vunpack.c.l.b16 %v3008
        %v3144 = vunpack.c.l.b16 %v3009
        %v3145 = vunpack.c.l.b16 %v3010
        %v3146 = vunpack.c.l.b16 %v3011
        %v3147 = vunpack.c.l.b16 %v3012
        %v3148 = vunpack.c.l.b16 %v3013
        %v3149 = vunpack.c.l.b16 %v3014
        %v3150 = vunpack.c.l.b16 %v3015
        %v3151 = vunpack.c.l.b16 %v3016
        %v3152 = vunpack.c.l.b16 %v3017
        %v3153 = vunpack.c.l.b16 %v3018
        %v3154 = vunpack.c.l.b16 %v3019
        %v3155 = vunpack.c.l.b16 %v3020
        %v3156 = vunpack.c.l.b16 %v3021
        %v3157 = vunpack.c.l.b16 %v3022
        %v3158 = vunpack.c.l.b16 %v3023
        %v3159 = vunpack.c.l.b16 %v3024
        %v3160 = vunpack.c.l.b16 %v3025
        %v3161 = vunpack.c.l.b16 %v3026
        %v3162 = vunpack.c.l.b16 %v3027
        %v3163 = vunpack.c.l.b16 %v3028
        %v3164 = vunpack.c.l.b16 %v3029
        %v3165 = vunpack.c.l.b16 %v3030
        %v3166 = vunpack.c.l.b16 %v3031
        %v3167 = vunpack.c.l.b16 %v3032
        %v3168 = vunpack.c.l.b16 %v3033
        %v3169 = vunpack.c.l.b16 %v3034
        %v3170 = vpack.c.b16 %v3107, %v3106
        %v3171 = vpack.c.b16 %v3109, %v3108
        %v3172 = vpack.c.b16 %v3111, %v3110
        %v3173 = vpack.c.b16 %v3113, %v3112
        %v3174 = vpack.c.b16 %v3115, %v3114
        %v3175 = vpack.c.b16 %v3117, %v3116
        %v3176 = vpack.c.b16 %v3119, %v3118
        %v3177 = vpack.c.b16 %v3121, %v3120
        %v3178 = vpack.c.b16 %v3123, %v3122
        %v3179 = vpack.c.b16 %v3125, %v3124
        %v3180 = vpack.c.b16 %v3127, %v3126
        %v3181 = vpack.c.b16 %v3129, %v3128
        %v3182 = vpack.c.b16 %v3131, %v3130
        %v3183 = vpack.c.b16 %v3133, %v3132
        %v3184 = vpack.c.b16 %v3135, %v3134
        %v3185 = vpack.c.b16 %v3137, %v3136
        %v3186 = vpack.c.b16 %v3139, %v3138
        %v3187 = vpack.c.b16 %v3141, %v3140
        %v3188 = vpack.c.b16 %v3143, %v3142
        %v3189 = vpack.c.b16 %v3145, %v3144
        %v3190 = vpack.c.b16 %v3147, %v3146
        %v3191 = vpack.c.b16 %v3149, %v3148
        %v3192 = vpack.c.b16 %v3151, %v3150
        %v3193 = vpack.c.b16 %v3153, %v3152
        %v3194 = vpack.c.b16 %v3155, %v3154
        %v3195 = vpack.c.b16 %v3157, %v3156
        %v3196 = vpack.c.b16 %v3159, %v3158
        %v3197 = vpack.c.b16 %v3161, %v3160
        %v3198 = vpack.c.b16 %v3163, %v3162
        %v3199 = vpack.c.b16 %v3165, %v3164
        %v3200 = vpack.c.b16 %v3167, %v3166
        %v3201 = vpack.c.b16 %v3169, %v3168
        %3234 = vmatprep.subr.bf16.mxu0 0
        %3235 = vmatpush1.bf16.msra.mxu0 %v3170
        %3236 = vmatprep.subr.bf16.mxu0 0
        %3237 = vmatpush1.bf16.msra.mxu0 %v3171
        %3238 = vmatprep.subr.bf16.mxu0 0
        %3239 = vmatpush1.bf16.msra.mxu0 %v3172
        %3240 = vmatprep.subr.bf16.mxu0 0
        %3241 = vmatpush1.bf16.msra.mxu0 %v3173
        %3242 = vmatprep.subr.bf16.mxu0 0
        %3243 = vmatpush1.bf16.msra.mxu0 %v3174
        %3244 = vmatprep.subr.bf16.mxu0 0
        %3245 = vmatpush1.bf16.msra.mxu0 %v3175
        %3246 = vmatprep.subr.bf16.mxu0 0
        %3247 = vmatpush1.bf16.msra.mxu0 %v3176
        %3248 = vmatprep.subr.bf16.mxu0 0
        %3249 = vmatpush1.bf16.msra.mxu0 %v3177
        %3250 = vmatprep.subr.bf16.mxu0 0
        %3251 = vmatpush1.bf16.msra.mxu0 %v3178
        %3252 = vmatprep.subr.bf16.mxu0 0
        %3253 = vmatpush1.bf16.msra.mxu0 %v3179
        %3254 = vmatprep.subr.bf16.mxu0 0
        %3255 = vmatpush1.bf16.msra.mxu0 %v3180
        %3256 = vmatprep.subr.bf16.mxu0 0
        %3257 = vmatpush1.bf16.msra.mxu0 %v3181
        %3258 = vmatprep.subr.bf16.mxu0 0
        %3259 = vmatpush1.bf16.msra.mxu0 %v3182
        %3260 = vmatprep.subr.bf16.mxu0 0
        %3261 = vmatpush1.bf16.msra.mxu0 %v3183
        %3262 = vmatprep.subr.bf16.mxu0 0
        %3263 = vmatpush1.bf16.msra.mxu0 %v3184
        %3264 = vmatprep.subr.bf16.mxu0 0
        %3265 = vmatpush1.bf16.msra.mxu0 %v3185
        %3266 = vmatprep.mubr.bf16.mxu0 %v2968
        %3267 = vmatmul.mubr.bf16.gmra.mrb[0].mxu0 %v2967
        %v3268 = vpop.f32.mrb[0].mxu0
        %v3269 = vadd.f32 %v3040, %v3268
        %v3270 = vpop.f32.mrb[0].mxu0
        %v3271 = vpop.f32.mrb[0].mxu0
        %v3272 = vpop.f32.mrb[0].mxu0
        %3273 = vdwg.mxu0
        %3274 = vmatprep.subr.bf16.mxu0 0
        %3275 = vmatpush1.bf16.msra.mxu0 %v3186
        %3276 = vmatprep.subr.bf16.mxu0 0
        %3277 = vmatpush1.bf16.msra.mxu0 %v3187
        %3278 = vmatprep.subr.bf16.mxu0 0
        %3279 = vmatpush1.bf16.msra.mxu0 %v3188
        %3280 = vmatprep.subr.bf16.mxu0 0
        %3281 = vmatpush1.bf16.msra.mxu0 %v3189
        %3282 = vmatprep.subr.bf16.mxu0 0
        %3283 = vmatpush1.bf16.msra.mxu0 %v3190
        %3284 = vmatprep.subr.bf16.mxu0 0
        %3285 = vmatpush1.bf16.msra.mxu0 %v3191
        %3286 = vmatprep.subr.bf16.mxu0 0
        %3287 = vmatpush1.bf16.msra.mxu0 %v3192
        %3288 = vmatprep.subr.bf16.mxu0 0
        %3289 = vmatpush1.bf16.msra.mxu0 %v3193
        %3290 = vmatprep.subr.bf16.mxu0 0
        %3291 = vmatpush1.bf16.msra.mxu0 %v3194
        %3292 = vmatprep.subr.bf16.mxu0 0
        %3293 = vmatpush1.bf16.msra.mxu0 %v3195
        %3294 = vmatprep.subr.bf16.mxu0 0
        %3295 = vmatpush1.bf16.msra.mxu0 %v3196
        %3296 = vmatprep.subr.bf16.mxu0 0
        %3297 = vmatpush1.bf16.msra.mxu0 %v3197
        %3298 = vmatprep.subr.bf16.mxu0 0
        %3299 = vmatpush1.bf16.msra.mxu0 %v3198
        %3300 = vmatprep.subr.bf16.mxu0 0
        %3301 = vmatpush1.bf16.msra.mxu0 %v3199
        %3302 = vmatprep.subr.bf16.mxu0 0
        %3303 = vmatpush1.bf16.msra.mxu0 %v3200
        %3304 = vmatprep.subr.bf16.mxu0 0
        %3305 = vmatpush1.bf16.msra.mxu0 %v3201
        %3306 = vmatprep.mubr.bf16.mxu0 %v2970
        %3307 = vmatmul.mubr.bf16.gmra.mrb[0].mxu0 %v2969
        %v3308 = vpop.f32.mrb[0].mxu0
        %v3309 = vadd.f32 %v3269, %v3308
        %v3310 = vpop.f32.mrb[0].mxu0
        %v3311 = vpop.f32.mrb[0].mxu0
        %v3312 = vpop.f32.mrb[0].mxu0
        %3313 = vdwg.mxu0
        %v3314 = vmax.f32 %v3309, 0.0
        %3315 = vst [vmem:[%s271] sm:$0xff] %v3314
        %s3316 = sand.u32 %s181, 1
        %s3317 = scalar_lea.sflag [#allocation3], %s3316
        %s3318 = sand.u32 %s181, 1
        %s3319 = smul.addr %s3318, 8
        %s3320 = scalar_lea.vmem [#allocation2], %s3319
        // Predicated region
        $region49: #{neural_network_forward.1} parent=47 // pred_check
          %p3321 = pneg %p191
        $region50: #{neural_network_forward.1} parent=47 // pred_check_branch
          %3323 = sbr.rel (%p3321) target = $region52
        $region51: #{neural_network_forward.1} parent=47 // pred_region
          %s3325 = ssub.s32 128, 128
          %3326 = vsyncadd %s3317, %s3325
          %s3327 = smul.addr %s21, 128
          %s3328 = scalar_lea.hbm %s7, %s3327
          %s3330 = sshll.u32 %s3320, 4
          %s3331 = int_to_ptr.vmem [resolvable:$true] %s3330
          %3333 = dma.vmem_to_hbm [thread:$0]  %s3331, 128, %s3328, %s3317
        $region52: #{neural_network_forward.1} parent=47 // pred_fallthru
          _
      $region48: #{neural_network_forward.1} parent=5 // pred_fallthru
        _
      %p3334 = scmp.le.s32.totalorder 2, %s16
      // Predicated region
      $region53: #{neural_network_forward.1} parent=5 // pred_check
        %p3335 = pneg %p3334
      $region54: #{neural_network_forward.1} parent=5 // pred_check_branch
        %3337 = sbr.rel (%p3335) target = $region56
      $region55: #{neural_network_forward.1} parent=5 // pred_region
        %s3338 = ssub.s32 %s16, 2
        // Predicated region
        $region57: #{neural_network_forward.1} parent=55 // pred_check
          %p3339 = pneg %p197
        $region58: #{neural_network_forward.1} parent=55 // pred_check_branch
          %3341 = sbr.rel (%p3339) target = $region60
        $region59: #{neural_network_forward.1} parent=55 // pred_region
          %s3342 = sand.u32 %s182, 1
          %s3343 = scalar_lea.sflag [#allocation3], %s3342
          %s3344 = sand.u32 %s182, 1
          %s3345 = smul.addr %s3344, 8
          %s3346 = scalar_lea.vmem [#allocation2], %s3345
          %3347 = dma.done %s3343, 128
        $region60: #{neural_network_forward.1} parent=55 // pred_fallthru
          _
      $region56: #{neural_network_forward.1} parent=5 // pred_fallthru
        _
    $region6: #{neural_network_forward.1} parent=1 // loop_footer
      %s20 = sadd.s32 1, %s16
    $region7: #{neural_network_forward.1} parent=1 // loop_footer_branch
      %15 = sbr.rel target = $region3
    $region8: #{neural_network_forward.1} parent=1 // loop_exit
      _
    %3348 = vsyncpa [#allocation3], 1
    %s3349 = scalar_lea.sflag [#allocation3], 1
    %3350 = vsyncpa %s3349, 1

</llo_original>
